<compile_context>
chip_gen: v7x
topology: tpu7x:2x2x1
jax: 0.10.0
libtpu: 0.0.40
codegen_flags: <defaults>
</compile_context>

<pallas_src>
import functools

import jax
import jax.numpy as jnp
from jax import lax
from jax.experimental import pallas as pl
from jax.experimental.pallas import tpu as pltpu


def _dense_concat_kernel(x_ref, w_ref, b_ref, col_ref, o_ref, stage_ref,
                         *, K, W, Cin, Cout, Nb, T, pad, single_tile):
    """Fused SAME-conv(KxK) + bias + ReLU + channel concat for one (Nb, T) block.

    x_ref:     (Nb, Cin, P)        f32  height-padded, edge-padded, flattened images
    w_ref:     (Cout, K*K*Cin)     bf16 flattened weights, cols ordered (kh, kw, cin)
    b_ref:     (Cout, 1)           f32  bias
    col_ref:   (1, T)              i32  column (w) index of each output lane in tile
    o_ref:     (Nb, Cin+Cout, T)   f32  [x ; relu(conv(x)+b)]
    stage_ref: (K*K*Cin, Nb*T)     bf16 in-VMEM im2col staging buffer
    """
    if single_tile:
        p0 = 0                                       # fully static slice starts
    else:
        p0 = pl.multiple_of(pl.program_id(1) * T, 128)

    # Hoisted loop invariants (JAX does not CSE these inside the tap loops).
    col = col_ref[...]                               # (1, T) int32
    w = w_ref[...]                                   # (Cout, KKC) bf16
    bias = b_ref[...]                                # (Cout, 1) f32

    # ---- build im2col patches in VMEM (no HBM blow-up) ---------------------------
    # Vertical out-of-range taps read genuine zero padding rows; only the width
    # edges need masking (flattened shift wraps across rows there).
    for b in range(Nb):
        for kh in range(K):
            for kw in range(K):
                tap = x_ref[b, :, pl.ds(p0 + kh * W + kw, T)]        # (Cin, T) f32
                if kw != pad:
                    wq = col + (kw - pad)
                    tap = jnp.where((wq >= 0) & (wq < W), tap, 0.0)
                row = (kh * K + kw) * Cin
                stage_ref[row:row + Cin, b * T:(b + 1) * T] = tap.astype(stage_ref.dtype)

    # ---- one wide MXU matmul for the whole block (bf16 in, f32 accum) -------------
    conv = jnp.dot(w, stage_ref[...], preferred_element_type=jnp.float32)  # (Cout, Nb*T)
    conv = jnp.maximum(conv + bias, 0.0)

    # ---- fused channel concat: [x ; relu(conv)] -----------------------------------
    ctr = pad * W + pad                              # offset of the untouched pixel
    for b in range(Nb):
        o_ref[b, :Cin, :] = x_ref[b, :, pl.ds(p0 + ctr, T)]          # exact f32 copy
        o_ref[b, Cin:, :] = conv[:, b * T:(b + 1) * T].astype(o_ref.dtype)


def _choose_tiling(N, Cin, Cout, K, H, W, budget_bytes=24 << 20):
    """Pick (images/step, lane tile) from an explicit per-step VMEM budget."""
    HW = H * W
    pad = K // 2
    P = (H + 2 * pad) * W + 2 * pad
    KKC = K * K * Cin
    Ctot = Cin + Cout

    if HW % 128 == 0:
        spatial_tiles = [t for t in range(HW, 0, -128) if HW % t == 0]  # largest first
    else:
        spatial_tiles = [HW]                          # full-extent block (always legal)

    def footprint(nb, t):
        return (2 * nb * Cin * P * 4                  # x block, double-buffered
                + 2 * nb * Ctot * t * 4               # output block, double-buffered
                + nb * KKC * t * 2                    # bf16 staging scratch (single)
                + 2 * t * 4                           # colmap block
                + KKC * Cout * 2 + Cout * 4)          # weights + bias (resident)

    for t in spatial_tiles:                           # priority 1: large lane tile
        for nb in (8, 4, 2, 1):                       # priority 2: amortize step overhead
            if N % nb:
                continue
            need = footprint(nb, t)
            if need <= budget_bytes:
                return nb, t, need
    nb, t = 1, spatial_tiles[-1]                      # tiny-shape / fallback path
    return nb, t, footprint(nb, t)


def dense_layer_forward(x, weight, bias):
    """DenseLayer.forward: (N, Cin, H, W) -> (N, Cin+Cout, H, W) = [x ; relu(conv(x)+b)]."""
    N, Cin, H, W = x.shape
    Cout, _, K, _ = weight.shape
    pad = K // 2
    HW = H * W
    P = (H + 2 * pad) * W + 2 * pad
    KKC = K * K * Cin
    Ctot = Cin + Cout

    # Height-pad + small flat edge pad (~(K-1)/H extra bytes); no im2col in HBM.
    x_ext = jnp.pad(
        jnp.pad(x, ((0, 0), (0, 0), (pad, pad), (0, 0))).reshape(N, Cin, (H + 2 * pad) * W),
        ((0, 0), (0, 0), (pad, pad)))

    # (O, I, Kh, Kw) -> (O, Kh, Kw, I) -> (O, KKC), bf16 for the MXU.
    w_flat = jnp.transpose(weight, (0, 2, 3, 1)).reshape(Cout, KKC).astype(jnp.bfloat16)
    b_col = bias.astype(jnp.float32).reshape(Cout, 1)
    colmap = (jnp.arange(HW, dtype=jnp.int32) % W).reshape(1, HW)   # w index per lane

    Nb, T, need = _choose_tiling(N, Cin, Cout, K, H, W)
    grid = (N // Nb, HW // T)
    single_tile = (HW // T == 1)

    kernel = functools.partial(_dense_concat_kernel, K=K, W=W, Cin=Cin, Cout=Cout,
                               Nb=Nb, T=T, pad=pad, single_tile=single_tile)

    cost = pl.CostEstimate(
        flops=2 * N * Cout * KKC * HW,
        transcendentals=0,
        bytes_accessed=(N * Cin * P * 4 + N * Ctot * HW * 4
                        + Cout * KKC * 2 + Cout * 4 + HW * 4))

    out_flat = pl.pallas_call(
        kernel,
        out_shape=jax.ShapeDtypeStruct((N, Ctot, HW), x.dtype),
        grid=grid,
        in_specs=[
            # whole padded image(s); block index constant across the spatial axis,
            # so it is fetched once per batch block (no re-DMA across tiles).
            pl.BlockSpec((Nb, Cin, P), lambda n, t: (n, 0, 0)),
            pl.BlockSpec((Cout, KKC), lambda n, t: (0, 0)),
            pl.BlockSpec((Cout, 1), lambda n, t: (0, 0)),
            pl.BlockSpec((1, T), lambda n, t: (0, t)),
        ],
        out_specs=pl.BlockSpec((Nb, Ctot, T), lambda n, t: (n, 0, t)),
        scratch_shapes=[pltpu.VMEM((KKC, Nb * T), jnp.bfloat16)],
        compiler_params=pltpu.CompilerParams(
            dimension_semantics=("parallel", "arbitrary"),
            vmem_limit_bytes=int(min(48 << 20, max(32 << 20, 2 * need))),
        ),
        cost_estimate=cost,
    )(x_ext, w_flat, b_col, colmap)

    # Trailing-dim split only; no transpose, no extra HBM pass.
    return out_flat.reshape(N, Ctot, H, W)


def _reference(x, weight, bias):
    """Pure-JAX f32 reference (lax conv) for correctness checking."""
    x_nhwc = jnp.transpose(x, (0, 2, 3, 1))
    w_hwio = jnp.transpose(weight, (2, 3, 1, 0))
    conv = lax.conv_general_dilated(
        x_nhwc, w_hwio, window_strides=(1, 1), padding="SAME",
        dimension_numbers=("NHWC", "HWIO", "NHWC"),
        precision=lax.Precision.HIGHEST)
    out_nhwc = jnp.concatenate(
        [x_nhwc, jnp.maximum(conv + bias[None, None, None, :], 0.0)], axis=-1)
    return jnp.transpose(out_nhwc, (0, 3, 1, 2))


if __name__ == "__main__":
    # Shapes consistent with DenseLayer(in_channels=4, out_channels=8, kernel_size=5)
    N, Cin, Cout, H, W, K = 2, 4, 8, 16, 16, 5

    key = jax.random.PRNGKey(0)
    kx, kwt, kb = jax.random.split(key, 3)

    x = jax.random.normal(kx, (N, Cin, H, W), dtype=jnp.float32)
    fan_in = Cin * K * K
    weight = jax.random.normal(kwt, (Cout, Cin, K, K), dtype=jnp.float32) * (1.0 / fan_in) ** 0.5
    bias = jax.random.normal(kb, (Cout,), dtype=jnp.float32) * 0.1

    fwd = jax.jit(dense_layer_forward)
    out = jax.block_until_ready(fwd(x, weight, bias))
    ref = jax.block_until_ready(_reference(x, weight, bias))

    assert out.shape == (N, Cin + Cout, H, W), out.shape
    # Pass-through channels bypass the bf16 matmul path -> must be exact.
    assert bool(jnp.array_equal(out[:, :Cin], x)), "pass-through channels differ"
    # Conv channels use bf16 MXU operands with f32 accumulation -> relaxed tolerance.
    max_err = float(jnp.max(jnp.abs(out - ref)))
    assert jnp.allclose(out, ref, atol=5e-2, rtol=5e-2), max_err

    print("KERNEL_OK")
</pallas_src>

<mosaic_0001>
module attributes {stable_mosaic.version = 11 : i64} {
  func.func @_dense_concat_kernel(%arg0: i32, %arg1: i32, %arg2: memref<2x4x324xf32, #tpu.memory_space<vmem>>, %arg3: memref<8x100xbf16, #tpu.memory_space<vmem>>, %arg4: memref<8x1xf32, #tpu.memory_space<vmem>>, %arg5: memref<1x256xi32, #tpu.memory_space<vmem>>, %arg6: memref<2x12x256xf32, #tpu.memory_space<vmem>>, %arg7: memref<100x512xbf16, #tpu.memory_space<vmem>>) attributes {dimension_semantics = [#tpu.dimension_semantics<parallel>, #tpu.dimension_semantics<arbitrary>], iteration_bounds = array<i64: 1, 1>, scalar_prefetch = 0 : i64, scratch_operands = 1 : i64, tpu.core_type = #tpu.core_type<tc>, window_params = [{transform_indices = @transform_0, window_bounds = array<i64: 2, 4, 324>}, {pipeline_mode = #tpu.pipeline_mode<synchronous>, transform_indices = @transform_1, window_bounds = array<i64: 8, 100>}, {pipeline_mode = #tpu.pipeline_mode<synchronous>, transform_indices = @transform_2, window_bounds = array<i64: 8, 1>}, {transform_indices = @transform_3, window_bounds = array<i64: 1, 256>}, {transform_indices = @transform_4, window_bounds = array<i64: 2, 12, 256>}]} {
    %c0 = arith.constant 0 : index
    %c0_0 = arith.constant 0 : index
    %0 = vector.load %arg5[%c0, %c0_0] : memref<1x256xi32, #tpu.memory_space<vmem>>, vector<1x256xi32>
    %c0_1 = arith.constant 0 : index
    %c0_2 = arith.constant 0 : index
    %1 = vector.load %arg3[%c0_1, %c0_2] : memref<8x100xbf16, #tpu.memory_space<vmem>>, vector<8x100xbf16>
    %c0_3 = arith.constant 0 : index
    %c0_4 = arith.constant 0 : index
    %2 = vector.load %arg4[%c0_3, %c0_4] : memref<8x1xf32, #tpu.memory_space<vmem>>, vector<8x1xf32>
    %c0_5 = arith.constant 0 : index
    %c0_6 = arith.constant 0 : index
    %c0_7 = arith.constant 0 : index
    %3 = vector.load %arg2[%c0_5, %c0_6, %c0_7] : memref<2x4x324xf32, #tpu.memory_space<vmem>>, vector<1x4x256xf32>
    %4 = vector.shape_cast %3 : vector<1x4x256xf32> to vector<4x256xf32>
    %c-2_i32 = arith.constant -2 : i32
    %5 = vector.broadcast %c-2_i32 : i32 to vector<1x256xi32>
    %6 = arith.addi %0, %5 : vector<1x256xi32>
    %c0_i32 = arith.constant 0 : i32
    %7 = vector.broadcast %c0_i32 : i32 to vector<1x256xi32>
    %8 = arith.cmpi sge, %6, %7 : vector<1x256xi32>
    %c16_i32 = arith.constant 16 : i32
    %9 = vector.broadcast %c16_i32 : i32 to vector<1x256xi32>
    %10 = arith.cmpi slt, %6, %9 : vector<1x256xi32>
    %11 = arith.andi %8, %10 : vector<1x256xi1>
    %cst = arith.constant 0.000000e+00 : f32
    %12 = vector.shape_cast %11 : vector<1x256xi1> to vector<1x256xi1>
    %13 = vector.broadcast %12 : vector<1x256xi1> to vector<4x256xi1>
    %14 = vector.broadcast %cst : f32 to vector<4x256xf32>
    %15 = arith.select %13, %4, %14 : vector<4x256xi1>, vector<4x256xf32>
    %16 = arith.truncf %15 : vector<4x256xf32> to vector<4x256xbf16>
    %c0_8 = arith.constant 0 : index
    %c0_9 = arith.constant 0 : index
    %17 = vector.load %arg7[%c0_8, %c0_9] : memref<100x512xbf16, #tpu.memory_space<vmem>>, vector<4x256xbf16>
    tpu.vector_store %arg7[%c0_8, %c0_9], %16 {strides = array<i32>} : memref<100x512xbf16, #tpu.memory_space<vmem>>, vector<4x256xbf16>,
    %c0_10 = arith.constant 0 : index
    %c0_11 = arith.constant 0 : index
    %c1 = arith.constant 1 : index
    %18 = vector.load %arg2[%c0_10, %c0_11, %c1] : memref<2x4x324xf32, #tpu.memory_space<vmem>>, vector<1x4x256xf32>
    %19 = vector.shape_cast %18 : vector<1x4x256xf32> to vector<4x256xf32>
    %c-1_i32 = arith.constant -1 : i32
    %20 = vector.broadcast %c-1_i32 : i32 to vector<1x256xi32>
    %21 = arith.addi %0, %20 : vector<1x256xi32>
    %c0_i32_12 = arith.constant 0 : i32
    %22 = vector.broadcast %c0_i32_12 : i32 to vector<1x256xi32>
    %23 = arith.cmpi sge, %21, %22 : vector<1x256xi32>
    %c16_i32_13 = arith.constant 16 : i32
    %24 = vector.broadcast %c16_i32_13 : i32 to vector<1x256xi32>
    %25 = arith.cmpi slt, %21, %24 : vector<1x256xi32>
    %26 = arith.andi %23, %25 : vector<1x256xi1>
    %cst_14 = arith.constant 0.000000e+00 : f32
    %27 = vector.shape_cast %26 : vector<1x256xi1> to vector<1x256xi1>
    %28 = vector.broadcast %27 : vector<1x256xi1> to vector<4x256xi1>
    %29 = vector.broadcast %cst_14 : f32 to vector<4x256xf32>
    %30 = arith.select %28, %19, %29 : vector<4x256xi1>, vector<4x256xf32>
    %31 = arith.truncf %30 : vector<4x256xf32> to vector<4x256xbf16>
    %c4 = arith.constant 4 : index
    %c0_15 = arith.constant 0 : index
    %32 = vector.load %arg7[%c4, %c0_15] : memref<100x512xbf16, #tpu.memory_space<vmem>>, vector<4x256xbf16>
    tpu.vector_store %arg7[%c4, %c0_15], %31 {strides = array<i32>} : memref<100x512xbf16, #tpu.memory_space<vmem>>, vector<4x256xbf16>,
    %c0_16 = arith.constant 0 : index
    %c0_17 = arith.constant 0 : index
    %c2 = arith.constant 2 : index
    %33 = vector.load %arg2[%c0_16, %c0_17, %c2] : memref<2x4x324xf32, #tpu.memory_space<vmem>>, vector<1x4x256xf32>
    %34 = vector.shape_cast %33 : vector<1x4x256xf32> to vector<4x256xf32>
    %35 = arith.truncf %34 : vector<4x256xf32> to vector<4x256xbf16>
    %c8 = arith.constant 8 : index
    %c0_18 = arith.constant 0 : index
    %36 = vector.load %arg7[%c8, %c0_18] : memref<100x512xbf16, #tpu.memory_space<vmem>>, vector<4x256xbf16>
    tpu.vector_store %arg7[%c8, %c0_18], %35 {strides = array<i32>} : memref<100x512xbf16, #tpu.memory_space<vmem>>, vector<4x256xbf16>,
    %c0_19 = arith.constant 0 : index
    %c0_20 = arith.constant 0 : index
    %c3 = arith.constant 3 : index
    %37 = vector.load %arg2[%c0_19, %c0_20, %c3] : memref<2x4x324xf32, #tpu.memory_space<vmem>>, vector<1x4x256xf32>
    %38 = vector.shape_cast %37 : vector<1x4x256xf32> to vector<4x256xf32>
    %c1_i32 = arith.constant 1 : i32
    %39 = vector.broadcast %c1_i32 : i32 to vector<1x256xi32>
    %40 = arith.addi %0, %39 : vector<1x256xi32>
    %c0_i32_21 = arith.constant 0 : i32
    %41 = vector.broadcast %c0_i32_21 : i32 to vector<1x256xi32>
    %42 = arith.cmpi sge, %40, %41 : vector<1x256xi32>
    %c16_i32_22 = arith.constant 16 : i32
    %43 = vector.broadcast %c16_i32_22 : i32 to vector<1x256xi32>
    %44 = arith.cmpi slt, %40, %43 : vector<1x256xi32>
    %45 = arith.andi %42, %44 : vector<1x256xi1>
    %cst_23 = arith.constant 0.000000e+00 : f32
    %46 = vector.shape_cast %45 : vector<1x256xi1> to vector<1x256xi1>
    %47 = vector.broadcast %46 : vector<1x256xi1> to vector<4x256xi1>
    %48 = vector.broadcast %cst_23 : f32 to vector<4x256xf32>
    %49 = arith.select %47, %38, %48 : vector<4x256xi1>, vector<4x256xf32>
    %50 = arith.truncf %49 : vector<4x256xf32> to vector<4x256xbf16>
    %c12 = arith.constant 12 : index
    %c0_24 = arith.constant 0 : index
    %51 = vector.load %arg7[%c12, %c0_24] : memref<100x512xbf16, #tpu.memory_space<vmem>>, vector<4x256xbf16>
    tpu.vector_store %arg7[%c12, %c0_24], %50 {strides = array<i32>} : memref<100x512xbf16, #tpu.memory_space<vmem>>, vector<4x256xbf16>,
    %c0_25 = arith.constant 0 : index
    %c0_26 = arith.constant 0 : index
    %c4_27 = arith.constant 4 : index
    %52 = vector.load %arg2[%c0_25, %c0_26, %c4_27] : memref<2x4x324xf32, #tpu.memory_space<vmem>>, vector<1x4x256xf32>
    %53 = vector.shape_cast %52 : vector<1x4x256xf32> to vector<4x256xf32>
    %c2_i32 = arith.constant 2 : i32
    %54 = vector.broadcast %c2_i32 : i32 to vector<1x256xi32>
    %55 = arith.addi %0, %54 : vector<1x256xi32>
    %c0_i32_28 = arith.constant 0 : i32
    %56 = vector.broadcast %c0_i32_28 : i32 to vector<1x256xi32>
    %57 = arith.cmpi sge, %55, %56 : vector<1x256xi32>
    %c16_i32_29 = arith.constant 16 : i32
    %58 = vector.broadcast %c16_i32_29 : i32 to vector<1x256xi32>
    %59 = arith.cmpi slt, %55, %58 : vector<1x256xi32>
    %60 = arith.andi %57, %59 : vector<1x256xi1>
    %cst_30 = arith.constant 0.000000e+00 : f32
    %61 = vector.shape_cast %60 : vector<1x256xi1> to vector<1x256xi1>
    %62 = vector.broadcast %61 : vector<1x256xi1> to vector<4x256xi1>
    %63 = vector.broadcast %cst_30 : f32 to vector<4x256xf32>
    %64 = arith.select %62, %53, %63 : vector<4x256xi1>, vector<4x256xf32>
    %65 = arith.truncf %64 : vector<4x256xf32> to vector<4x256xbf16>
    %c16 = arith.constant 16 : index
    %c0_31 = arith.constant 0 : index
    %66 = vector.load %arg7[%c16, %c0_31] : memref<100x512xbf16, #tpu.memory_space<vmem>>, vector<4x256xbf16>
    tpu.vector_store %arg7[%c16, %c0_31], %65 {strides = array<i32>} : memref<100x512xbf16, #tpu.memory_space<vmem>>, vector<4x256xbf16>,
    %c0_32 = arith.constant 0 : index
    %c0_33 = arith.constant 0 : index
    %c16_34 = arith.constant 16 : index
    %67 = vector.load %arg2[%c0_32, %c0_33, %c16_34] : memref<2x4x324xf32, #tpu.memory_space<vmem>>, vector<1x4x256xf32>
    %68 = vector.shape_cast %67 : vector<1x4x256xf32> to vector<4x256xf32>
    %c-2_i32_35 = arith.constant -2 : i32
    %69 = vector.broadcast %c-2_i32_35 : i32 to vector<1x256xi32>
    %70 = arith.addi %0, %69 : vector<1x256xi32>
    %c0_i32_36 = arith.constant 0 : i32
    %71 = vector.broadcast %c0_i32_36 : i32 to vector<1x256xi32>
    %72 = arith.cmpi sge, %70, %71 : vector<1x256xi32>
    %c16_i32_37 = arith.constant 16 : i32
    %73 = vector.broadcast %c16_i32_37 : i32 to vector<1x256xi32>
    %74 = arith.cmpi slt, %70, %73 : vector<1x256xi32>
    %75 = arith.andi %72, %74 : vector<1x256xi1>
    %cst_38 = arith.constant 0.000000e+00 : f32
    %76 = vector.shape_cast %75 : vector<1x256xi1> to vector<1x256xi1>
    %77 = vector.broadcast %76 : vector<1x256xi1> to vector<4x256xi1>
    %78 = vector.broadcast %cst_38 : f32 to vector<4x256xf32>
    %79 = arith.select %77, %68, %78 : vector<4x256xi1>, vector<4x256xf32>
    %80 = arith.truncf %79 : vector<4x256xf32> to vector<4x256xbf16>
    %c20 = arith.constant 20 : index
    %c0_39 = arith.constant 0 : index
    %81 = vector.load %arg7[%c20, %c0_39] : memref<100x512xbf16, #tpu.memory_space<vmem>>, vector<4x256xbf16>
    tpu.vector_store %arg7[%c20, %c0_39], %80 {strides = array<i32>} : memref<100x512xbf16, #tpu.memory_space<vmem>>, vector<4x256xbf16>,
    %c0_40 = arith.constant 0 : index
    %c0_41 = arith.constant 0 : index
    %c17 = arith.constant 17 : index
    %82 = vector.load %arg2[%c0_40, %c0_41, %c17] : memref<2x4x324xf32, #tpu.memory_space<vmem>>, vector<1x4x256xf32>
    %83 = vector.shape_cast %82 : vector<1x4x256xf32> to vector<4x256xf32>
    %c-1_i32_42 = arith.constant -1 : i32
    %84 = vector.broadcast %c-1_i32_42 : i32 to vector<1x256xi32>
    %85 = arith.addi %0, %84 : vector<1x256xi32>
    %c0_i32_43 = arith.constant 0 : i32
    %86 = vector.broadcast %c0_i32_43 : i32 to vector<1x256xi32>
    %87 = arith.cmpi sge, %85, %86 : vector<1x256xi32>
    %c16_i32_44 = arith.constant 16 : i32
    %88 = vector.broadcast %c16_i32_44 : i32 to vector<1x256xi32>
    %89 = arith.cmpi slt, %85, %88 : vector<1x256xi32>
    %90 = arith.andi %87, %89 : vector<1x256xi1>
    %cst_45 = arith.constant 0.000000e+00 : f32
    %91 = vector.shape_cast %90 : vector<1x256xi1> to vector<1x256xi1>
    %92 = vector.broadcast %91 : vector<1x256xi1> to vector<4x256xi1>
    %93 = vector.broadcast %cst_45 : f32 to vector<4x256xf32>
    %94 = arith.select %92, %83, %93 : vector<4x256xi1>, vector<4x256xf32>
    %95 = arith.truncf %94 : vector<4x256xf32> to vector<4x256xbf16>
    %c24 = arith.constant 24 : index
    %c0_46 = arith.constant 0 : index
    %96 = vector.load %arg7[%c24, %c0_46] : memref<100x512xbf16, #tpu.memory_space<vmem>>, vector<4x256xbf16>
    tpu.vector_store %arg7[%c24, %c0_46], %95 {strides = array<i32>} : memref<100x512xbf16, #tpu.memory_space<vmem>>, vector<4x256xbf16>,
    %c0_47 = arith.constant 0 : index
    %c0_48 = arith.constant 0 : index
    %c18 = arith.constant 18 : index
    %97 = vector.load %arg2[%c0_47, %c0_48, %c18] : memref<2x4x324xf32, #tpu.memory_space<vmem>>, vector<1x4x256xf32>
    %98 = vector.shape_cast %97 : vector<1x4x256xf32> to vector<4x256xf32>
    %99 = arith.truncf %98 : vector<4x256xf32> to vector<4x256xbf16>
    %c28 = arith.constant 28 : index
    %c0_49 = arith.constant 0 : index
    %100 = vector.load %arg7[%c28, %c0_49] : memref<100x512xbf16, #tpu.memory_space<vmem>>, vector<4x256xbf16>
    tpu.vector_store %arg7[%c28, %c0_49], %99 {strides = array<i32>} : memref<100x512xbf16, #tpu.memory_space<vmem>>, vector<4x256xbf16>,
    %c0_50 = arith.constant 0 : index
    %c0_51 = arith.constant 0 : index
    %c19 = arith.constant 19 : index
    %101 = vector.load %arg2[%c0_50, %c0_51, %c19] : memref<2x4x324xf32, #tpu.memory_space<vmem>>, vector<1x4x256xf32>
    %102 = vector.shape_cast %101 : vector<1x4x256xf32> to vector<4x256xf32>
    %c1_i32_52 = arith.constant 1 : i32
    %103 = vector.broadcast %c1_i32_52 : i32 to vector<1x256xi32>
    %104 = arith.addi %0, %103 : vector<1x256xi32>
    %c0_i32_53 = arith.constant 0 : i32
    %105 = vector.broadcast %c0_i32_53 : i32 to vector<1x256xi32>
    %106 = arith.cmpi sge, %104, %105 : vector<1x256xi32>
    %c16_i32_54 = arith.constant 16 : i32
    %107 = vector.broadcast %c16_i32_54 : i32 to vector<1x256xi32>
    %108 = arith.cmpi slt, %104, %107 : vector<1x256xi32>
    %109 = arith.andi %106, %108 : vector<1x256xi1>
    %cst_55 = arith.constant 0.000000e+00 : f32
    %110 = vector.shape_cast %109 : vector<1x256xi1> to vector<1x256xi1>
    %111 = vector.broadcast %110 : vector<1x256xi1> to vector<4x256xi1>
    %112 = vector.broadcast %cst_55 : f32 to vector<4x256xf32>
    %113 = arith.select %111, %102, %112 : vector<4x256xi1>, vector<4x256xf32>
    %114 = arith.truncf %113 : vector<4x256xf32> to vector<4x256xbf16>
    %c32 = arith.constant 32 : index
    %c0_56 = arith.constant 0 : index
    %115 = vector.load %arg7[%c32, %c0_56] : memref<100x512xbf16, #tpu.memory_space<vmem>>, vector<4x256xbf16>
    tpu.vector_store %arg7[%c32, %c0_56], %114 {strides = array<i32>} : memref<100x512xbf16, #tpu.memory_space<vmem>>, vector<4x256xbf16>,
    %c0_57 = arith.constant 0 : index
    %c0_58 = arith.constant 0 : index
    %c20_59 = arith.constant 20 : index
    %116 = vector.load %arg2[%c0_57, %c0_58, %c20_59] : memref<2x4x324xf32, #tpu.memory_space<vmem>>, vector<1x4x256xf32>
    %117 = vector.shape_cast %116 : vector<1x4x256xf32> to vector<4x256xf32>
    %c2_i32_60 = arith.constant 2 : i32
    %118 = vector.broadcast %c2_i32_60 : i32 to vector<1x256xi32>
    %119 = arith.addi %0, %118 : vector<1x256xi32>
    %c0_i32_61 = arith.constant 0 : i32
    %120 = vector.broadcast %c0_i32_61 : i32 to vector<1x256xi32>
    %121 = arith.cmpi sge, %119, %120 : vector<1x256xi32>
    %c16_i32_62 = arith.constant 16 : i32
    %122 = vector.broadcast %c16_i32_62 : i32 to vector<1x256xi32>
    %123 = arith.cmpi slt, %119, %122 : vector<1x256xi32>
    %124 = arith.andi %121, %123 : vector<1x256xi1>
    %cst_63 = arith.constant 0.000000e+00 : f32
    %125 = vector.shape_cast %124 : vector<1x256xi1> to vector<1x256xi1>
    %126 = vector.broadcast %125 : vector<1x256xi1> to vector<4x256xi1>
    %127 = vector.broadcast %cst_63 : f32 to vector<4x256xf32>
    %128 = arith.select %126, %117, %127 : vector<4x256xi1>, vector<4x256xf32>
    %129 = arith.truncf %128 : vector<4x256xf32> to vector<4x256xbf16>
    %c36 = arith.constant 36 : index
    %c0_64 = arith.constant 0 : index
    %130 = vector.load %arg7[%c36, %c0_64] : memref<100x512xbf16, #tpu.memory_space<vmem>>, vector<4x256xbf16>
    tpu.vector_store %arg7[%c36, %c0_64], %129 {strides = array<i32>} : memref<100x512xbf16, #tpu.memory_space<vmem>>, vector<4x256xbf16>,
    %c0_65 = arith.constant 0 : index
    %c0_66 = arith.constant 0 : index
    %c32_67 = arith.constant 32 : index
    %131 = vector.load %arg2[%c0_65, %c0_66, %c32_67] : memref<2x4x324xf32, #tpu.memory_space<vmem>>, vector<1x4x256xf32>
    %132 = vector.shape_cast %131 : vector<1x4x256xf32> to vector<4x256xf32>
    %c-2_i32_68 = arith.constant -2 : i32
    %133 = vector.broadcast %c-2_i32_68 : i32 to vector<1x256xi32>
    %134 = arith.addi %0, %133 : vector<1x256xi32>
    %c0_i32_69 = arith.constant 0 : i32
    %135 = vector.broadcast %c0_i32_69 : i32 to vector<1x256xi32>
    %136 = arith.cmpi sge, %134, %135 : vector<1x256xi32>
    %c16_i32_70 = arith.constant 16 : i32
    %137 = vector.broadcast %c16_i32_70 : i32 to vector<1x256xi32>
    %138 = arith.cmpi slt, %134, %137 : vector<1x256xi32>
    %139 = arith.andi %136, %138 : vector<1x256xi1>
    %cst_71 = arith.constant 0.000000e+00 : f32
    %140 = vector.shape_cast %139 : vector<1x256xi1> to vector<1x256xi1>
    %141 = vector.broadcast %140 : vector<1x256xi1> to vector<4x256xi1>
    %142 = vector.broadcast %cst_71 : f32 to vector<4x256xf32>
    %143 = arith.select %141, %132, %142 : vector<4x256xi1>, vector<4x256xf32>
    %144 = arith.truncf %143 : vector<4x256xf32> to vector<4x256xbf16>
    %c40 = arith.constant 40 : index
    %c0_72 = arith.constant 0 : index
    %145 = vector.load %arg7[%c40, %c0_72] : memref<100x512xbf16, #tpu.memory_space<vmem>>, vector<4x256xbf16>
    tpu.vector_store %arg7[%c40, %c0_72], %144 {strides = array<i32>} : memref<100x512xbf16, #tpu.memory_space<vmem>>, vector<4x256xbf16>,
    %c0_73 = arith.constant 0 : index
    %c0_74 = arith.constant 0 : index
    %c33 = arith.constant 33 : index
    %146 = vector.load %arg2[%c0_73, %c0_74, %c33] : memref<2x4x324xf32, #tpu.memory_space<vmem>>, vector<1x4x256xf32>
    %147 = vector.shape_cast %146 : vector<1x4x256xf32> to vector<4x256xf32>
    %c-1_i32_75 = arith.constant -1 : i32
    %148 = vector.broadcast %c-1_i32_75 : i32 to vector<1x256xi32>
    %149 = arith.addi %0, %148 : vector<1x256xi32>
    %c0_i32_76 = arith.constant 0 : i32
    %150 = vector.broadcast %c0_i32_76 : i32 to vector<1x256xi32>
    %151 = arith.cmpi sge, %149, %150 : vector<1x256xi32>
    %c16_i32_77 = arith.constant 16 : i32
    %152 = vector.broadcast %c16_i32_77 : i32 to vector<1x256xi32>
    %153 = arith.cmpi slt, %149, %152 : vector<1x256xi32>
    %154 = arith.andi %151, %153 : vector<1x256xi1>
    %cst_78 = arith.constant 0.000000e+00 : f32
    %155 = vector.shape_cast %154 : vector<1x256xi1> to vector<1x256xi1>
    %156 = vector.broadcast %155 : vector<1x256xi1> to vector<4x256xi1>
    %157 = vector.broadcast %cst_78 : f32 to vector<4x256xf32>
    %158 = arith.select %156, %147, %157 : vector<4x256xi1>, vector<4x256xf32>
    %159 = arith.truncf %158 : vector<4x256xf32> to vector<4x256xbf16>
    %c44 = arith.constant 44 : index
    %c0_79 = arith.constant 0 : index
    %160 = vector.load %arg7[%c44, %c0_79] : memref<100x512xbf16, #tpu.memory_space<vmem>>, vector<4x256xbf16>
    tpu.vector_store %arg7[%c44, %c0_79], %159 {strides = array<i32>} : memref<100x512xbf16, #tpu.memory_space<vmem>>, vector<4x256xbf16>,
    %c0_80 = arith.constant 0 : index
    %c0_81 = arith.constant 0 : index
    %c34 = arith.constant 34 : index
    %161 = vector.load %arg2[%c0_80, %c0_81, %c34] : memref<2x4x324xf32, #tpu.memory_space<vmem>>, vector<1x4x256xf32>
    %162 = vector.shape_cast %161 : vector<1x4x256xf32> to vector<4x256xf32>
    %163 = arith.truncf %162 : vector<4x256xf32> to vector<4x256xbf16>
    %c48 = arith.constant 48 : index
    %c0_82 = arith.constant 0 : index
    %164 = vector.load %arg7[%c48, %c0_82] : memref<100x512xbf16, #tpu.memory_space<vmem>>, vector<4x256xbf16>
    tpu.vector_store %arg7[%c48, %c0_82], %163 {strides = array<i32>} : memref<100x512xbf16, #tpu.memory_space<vmem>>, vector<4x256xbf16>,
    %c0_83 = arith.constant 0 : index
    %c0_84 = arith.constant 0 : index
    %c35 = arith.constant 35 : index
    %165 = vector.load %arg2[%c0_83, %c0_84, %c35] : memref<2x4x324xf32, #tpu.memory_space<vmem>>, vector<1x4x256xf32>
    %166 = vector.shape_cast %165 : vector<1x4x256xf32> to vector<4x256xf32>
    %c1_i32_85 = arith.constant 1 : i32
    %167 = vector.broadcast %c1_i32_85 : i32 to vector<1x256xi32>
    %168 = arith.addi %0, %167 : vector<1x256xi32>
    %c0_i32_86 = arith.constant 0 : i32
    %169 = vector.broadcast %c0_i32_86 : i32 to vector<1x256xi32>
    %170 = arith.cmpi sge, %168, %169 : vector<1x256xi32>
    %c16_i32_87 = arith.constant 16 : i32
    %171 = vector.broadcast %c16_i32_87 : i32 to vector<1x256xi32>
    %172 = arith.cmpi slt, %168, %171 : vector<1x256xi32>
    %173 = arith.andi %170, %172 : vector<1x256xi1>
    %cst_88 = arith.constant 0.000000e+00 : f32
    %174 = vector.shape_cast %173 : vector<1x256xi1> to vector<1x256xi1>
    %175 = vector.broadcast %174 : vector<1x256xi1> to vector<4x256xi1>
    %176 = vector.broadcast %cst_88 : f32 to vector<4x256xf32>
    %177 = arith.select %175, %166, %176 : vector<4x256xi1>, vector<4x256xf32>
    %178 = arith.truncf %177 : vector<4x256xf32> to vector<4x256xbf16>
    %c52 = arith.constant 52 : index
    %c0_89 = arith.constant 0 : index
    %179 = vector.load %arg7[%c52, %c0_89] : memref<100x512xbf16, #tpu.memory_space<vmem>>, vector<4x256xbf16>
    tpu.vector_store %arg7[%c52, %c0_89], %178 {strides = array<i32>} : memref<100x512xbf16, #tpu.memory_space<vmem>>, vector<4x256xbf16>,
    %c0_90 = arith.constant 0 : index
    %c0_91 = arith.constant 0 : index
    %c36_92 = arith.constant 36 : index
    %180 = vector.load %arg2[%c0_90, %c0_91, %c36_92] : memref<2x4x324xf32, #tpu.memory_space<vmem>>, vector<1x4x256xf32>
    %181 = vector.shape_cast %180 : vector<1x4x256xf32> to vector<4x256xf32>
    %c2_i32_93 = arith.constant 2 : i32
    %182 = vector.broadcast %c2_i32_93 : i32 to vector<1x256xi32>
    %183 = arith.addi %0, %182 : vector<1x256xi32>
    %c0_i32_94 = arith.constant 0 : i32
    %184 = vector.broadcast %c0_i32_94 : i32 to vector<1x256xi32>
    %185 = arith.cmpi sge, %183, %184 : vector<1x256xi32>
    %c16_i32_95 = arith.constant 16 : i32
    %186 = vector.broadcast %c16_i32_95 : i32 to vector<1x256xi32>
    %187 = arith.cmpi slt, %183, %186 : vector<1x256xi32>
    %188 = arith.andi %185, %187 : vector<1x256xi1>
    %cst_96 = arith.constant 0.000000e+00 : f32
    %189 = vector.shape_cast %188 : vector<1x256xi1> to vector<1x256xi1>
    %190 = vector.broadcast %189 : vector<1x256xi1> to vector<4x256xi1>
    %191 = vector.broadcast %cst_96 : f32 to vector<4x256xf32>
    %192 = arith.select %190, %181, %191 : vector<4x256xi1>, vector<4x256xf32>
    %193 = arith.truncf %192 : vector<4x256xf32> to vector<4x256xbf16>
    %c56 = arith.constant 56 : index
    %c0_97 = arith.constant 0 : index
    %194 = vector.load %arg7[%c56, %c0_97] : memref<100x512xbf16, #tpu.memory_space<vmem>>, vector<4x256xbf16>
    tpu.vector_store %arg7[%c56, %c0_97], %193 {strides = array<i32>} : memref<100x512xbf16, #tpu.memory_space<vmem>>, vector<4x256xbf16>,
    %c0_98 = arith.constant 0 : index
    %c0_99 = arith.constant 0 : index
    %c48_100 = arith.constant 48 : index
    %195 = vector.load %arg2[%c0_98, %c0_99, %c48_100] : memref<2x4x324xf32, #tpu.memory_space<vmem>>, vector<1x4x256xf32>
    %196 = vector.shape_cast %195 : vector<1x4x256xf32> to vector<4x256xf32>
    %c-2_i32_101 = arith.constant -2 : i32
    %197 = vector.broadcast %c-2_i32_101 : i32 to vector<1x256xi32>
    %198 = arith.addi %0, %197 : vector<1x256xi32>
    %c0_i32_102 = arith.constant 0 : i32
    %199 = vector.broadcast %c0_i32_102 : i32 to vector<1x256xi32>
    %200 = arith.cmpi sge, %198, %199 : vector<1x256xi32>
    %c16_i32_103 = arith.constant 16 : i32
    %201 = vector.broadcast %c16_i32_103 : i32 to vector<1x256xi32>
    %202 = arith.cmpi slt, %198, %201 : vector<1x256xi32>
    %203 = arith.andi %200, %202 : vector<1x256xi1>
    %cst_104 = arith.constant 0.000000e+00 : f32
    %204 = vector.shape_cast %203 : vector<1x256xi1> to vector<1x256xi1>
    %205 = vector.broadcast %204 : vector<1x256xi1> to vector<4x256xi1>
    %206 = vector.broadcast %cst_104 : f32 to vector<4x256xf32>
    %207 = arith.select %205, %196, %206 : vector<4x256xi1>, vector<4x256xf32>
    %208 = arith.truncf %207 : vector<4x256xf32> to vector<4x256xbf16>
    %c60 = arith.constant 60 : index
    %c0_105 = arith.constant 0 : index
    %209 = vector.load %arg7[%c60, %c0_105] : memref<100x512xbf16, #tpu.memory_space<vmem>>, vector<4x256xbf16>
    tpu.vector_store %arg7[%c60, %c0_105], %208 {strides = array<i32>} : memref<100x512xbf16, #tpu.memory_space<vmem>>, vector<4x256xbf16>,
    %c0_106 = arith.constant 0 : index
    %c0_107 = arith.constant 0 : index
    %c49 = arith.constant 49 : index
    %210 = vector.load %arg2[%c0_106, %c0_107, %c49] : memref<2x4x324xf32, #tpu.memory_space<vmem>>, vector<1x4x256xf32>
    %211 = vector.shape_cast %210 : vector<1x4x256xf32> to vector<4x256xf32>
    %c-1_i32_108 = arith.constant -1 : i32
    %212 = vector.broadcast %c-1_i32_108 : i32 to vector<1x256xi32>
    %213 = arith.addi %0, %212 : vector<1x256xi32>
    %c0_i32_109 = arith.constant 0 : i32
    %214 = vector.broadcast %c0_i32_109 : i32 to vector<1x256xi32>
    %215 = arith.cmpi sge, %213, %214 : vector<1x256xi32>
    %c16_i32_110 = arith.constant 16 : i32
    %216 = vector.broadcast %c16_i32_110 : i32 to vector<1x256xi32>
    %217 = arith.cmpi slt, %213, %216 : vector<1x256xi32>
    %218 = arith.andi %215, %217 : vector<1x256xi1>
    %cst_111 = arith.constant 0.000000e+00 : f32
    %219 = vector.shape_cast %218 : vector<1x256xi1> to vector<1x256xi1>
    %220 = vector.broadcast %219 : vector<1x256xi1> to vector<4x256xi1>
    %221 = vector.broadcast %cst_111 : f32 to vector<4x256xf32>
    %222 = arith.select %220, %211, %221 : vector<4x256xi1>, vector<4x256xf32>
    %223 = arith.truncf %222 : vector<4x256xf32> to vector<4x256xbf16>
    %c64 = arith.constant 64 : index
    %c0_112 = arith.constant 0 : index
    %224 = vector.load %arg7[%c64, %c0_112] : memref<100x512xbf16, #tpu.memory_space<vmem>>, vector<4x256xbf16>
    tpu.vector_store %arg7[%c64, %c0_112], %223 {strides = array<i32>} : memref<100x512xbf16, #tpu.memory_space<vmem>>, vector<4x256xbf16>,
    %c0_113 = arith.constant 0 : index
    %c0_114 = arith.constant 0 : index
    %c50 = arith.constant 50 : index
    %225 = vector.load %arg2[%c0_113, %c0_114, %c50] : memref<2x4x324xf32, #tpu.memory_space<vmem>>, vector<1x4x256xf32>
    %226 = vector.shape_cast %225 : vector<1x4x256xf32> to vector<4x256xf32>
    %227 = arith.truncf %226 : vector<4x256xf32> to vector<4x256xbf16>
    %c68 = arith.constant 68 : index
    %c0_115 = arith.constant 0 : index
    %228 = vector.load %arg7[%c68, %c0_115] : memref<100x512xbf16, #tpu.memory_space<vmem>>, vector<4x256xbf16>
    tpu.vector_store %arg7[%c68, %c0_115], %227 {strides = array<i32>} : memref<100x512xbf16, #tpu.memory_space<vmem>>, vector<4x256xbf16>,
    %c0_116 = arith.constant 0 : index
    %c0_117 = arith.constant 0 : index
    %c51 = arith.constant 51 : index
    %229 = vector.load %arg2[%c0_116, %c0_117, %c51] : memref<2x4x324xf32, #tpu.memory_space<vmem>>, vector<1x4x256xf32>
    %230 = vector.shape_cast %229 : vector<1x4x256xf32> to vector<4x256xf32>
    %c1_i32_118 = arith.constant 1 : i32
    %231 = vector.broadcast %c1_i32_118 : i32 to vector<1x256xi32>
    %232 = arith.addi %0, %231 : vector<1x256xi32>
    %c0_i32_119 = arith.constant 0 : i32
    %233 = vector.broadcast %c0_i32_119 : i32 to vector<1x256xi32>
    %234 = arith.cmpi sge, %232, %233 : vector<1x256xi32>
    %c16_i32_120 = arith.constant 16 : i32
    %235 = vector.broadcast %c16_i32_120 : i32 to vector<1x256xi32>
    %236 = arith.cmpi slt, %232, %235 : vector<1x256xi32>
    %237 = arith.andi %234, %236 : vector<1x256xi1>
    %cst_121 = arith.constant 0.000000e+00 : f32
    %238 = vector.shape_cast %237 : vector<1x256xi1> to vector<1x256xi1>
    %239 = vector.broadcast %238 : vector<1x256xi1> to vector<4x256xi1>
    %240 = vector.broadcast %cst_121 : f32 to vector<4x256xf32>
    %241 = arith.select %239, %230, %240 : vector<4x256xi1>, vector<4x256xf32>
    %242 = arith.truncf %241 : vector<4x256xf32> to vector<4x256xbf16>
    %c72 = arith.constant 72 : index
    %c0_122 = arith.constant 0 : index
    %243 = vector.load %arg7[%c72, %c0_122] : memref<100x512xbf16, #tpu.memory_space<vmem>>, vector<4x256xbf16>
    tpu.vector_store %arg7[%c72, %c0_122], %242 {strides = array<i32>} : memref<100x512xbf16, #tpu.memory_space<vmem>>, vector<4x256xbf16>,
    %c0_123 = arith.constant 0 : index
    %c0_124 = arith.constant 0 : index
    %c52_125 = arith.constant 52 : index
    %244 = vector.load %arg2[%c0_123, %c0_124, %c52_125] : memref<2x4x324xf32, #tpu.memory_space<vmem>>, vector<1x4x256xf32>
    %245 = vector.shape_cast %244 : vector<1x4x256xf32> to vector<4x256xf32>
    %c2_i32_126 = arith.constant 2 : i32
    %246 = vector.broadcast %c2_i32_126 : i32 to vector<1x256xi32>
    %247 = arith.addi %0, %246 : vector<1x256xi32>
    %c0_i32_127 = arith.constant 0 : i32
    %248 = vector.broadcast %c0_i32_127 : i32 to vector<1x256xi32>
    %249 = arith.cmpi sge, %247, %248 : vector<1x256xi32>
    %c16_i32_128 = arith.constant 16 : i32
    %250 = vector.broadcast %c16_i32_128 : i32 to vector<1x256xi32>
    %251 = arith.cmpi slt, %247, %250 : vector<1x256xi32>
    %252 = arith.andi %249, %251 : vector<1x256xi1>
    %cst_129 = arith.constant 0.000000e+00 : f32
    %253 = vector.shape_cast %252 : vector<1x256xi1> to vector<1x256xi1>
    %254 = vector.broadcast %253 : vector<1x256xi1> to vector<4x256xi1>
    %255 = vector.broadcast %cst_129 : f32 to vector<4x256xf32>
    %256 = arith.select %254, %245, %255 : vector<4x256xi1>, vector<4x256xf32>
    %257 = arith.truncf %256 : vector<4x256xf32> to vector<4x256xbf16>
    %c76 = arith.constant 76 : index
    %c0_130 = arith.constant 0 : index
    %258 = vector.load %arg7[%c76, %c0_130] : memref<100x512xbf16, #tpu.memory_space<vmem>>, vector<4x256xbf16>
    tpu.vector_store %arg7[%c76, %c0_130], %257 {strides = array<i32>} : memref<100x512xbf16, #tpu.memory_space<vmem>>, vector<4x256xbf16>,
    %c0_131 = arith.constant 0 : index
    %c0_132 = arith.constant 0 : index
    %c64_133 = arith.constant 64 : index
    %259 = vector.load %arg2[%c0_131, %c0_132, %c64_133] : memref<2x4x324xf32, #tpu.memory_space<vmem>>, vector<1x4x256xf32>
    %260 = vector.shape_cast %259 : vector<1x4x256xf32> to vector<4x256xf32>
    %c-2_i32_134 = arith.constant -2 : i32
    %261 = vector.broadcast %c-2_i32_134 : i32 to vector<1x256xi32>
    %262 = arith.addi %0, %261 : vector<1x256xi32>
    %c0_i32_135 = arith.constant 0 : i32
    %263 = vector.broadcast %c0_i32_135 : i32 to vector<1x256xi32>
    %264 = arith.cmpi sge, %262, %263 : vector<1x256xi32>
    %c16_i32_136 = arith.constant 16 : i32
    %265 = vector.broadcast %c16_i32_136 : i32 to vector<1x256xi32>
    %266 = arith.cmpi slt, %262, %265 : vector<1x256xi32>
    %267 = arith.andi %264, %266 : vector<1x256xi1>
    %cst_137 = arith.constant 0.000000e+00 : f32
    %268 = vector.shape_cast %267 : vector<1x256xi1> to vector<1x256xi1>
    %269 = vector.broadcast %268 : vector<1x256xi1> to vector<4x256xi1>
    %270 = vector.broadcast %cst_137 : f32 to vector<4x256xf32>
    %271 = arith.select %269, %260, %270 : vector<4x256xi1>, vector<4x256xf32>
    %272 = arith.truncf %271 : vector<4x256xf32> to vector<4x256xbf16>
    %c80 = arith.constant 80 : index
    %c0_138 = arith.constant 0 : index
    %273 = vector.load %arg7[%c80, %c0_138] : memref<100x512xbf16, #tpu.memory_space<vmem>>, vector<4x256xbf16>
    tpu.vector_store %arg7[%c80, %c0_138], %272 {strides = array<i32>} : memref<100x512xbf16, #tpu.memory_space<vmem>>, vector<4x256xbf16>,
    %c0_139 = arith.constant 0 : index
    %c0_140 = arith.constant 0 : index
    %c65 = arith.constant 65 : index
    %274 = vector.load %arg2[%c0_139, %c0_140, %c65] : memref<2x4x324xf32, #tpu.memory_space<vmem>>, vector<1x4x256xf32>
    %275 = vector.shape_cast %274 : vector<1x4x256xf32> to vector<4x256xf32>
    %c-1_i32_141 = arith.constant -1 : i32
    %276 = vector.broadcast %c-1_i32_141 : i32 to vector<1x256xi32>
    %277 = arith.addi %0, %276 : vector<1x256xi32>
    %c0_i32_142 = arith.constant 0 : i32
    %278 = vector.broadcast %c0_i32_142 : i32 to vector<1x256xi32>
    %279 = arith.cmpi sge, %277, %278 : vector<1x256xi32>
    %c16_i32_143 = arith.constant 16 : i32
    %280 = vector.broadcast %c16_i32_143 : i32 to vector<1x256xi32>
    %281 = arith.cmpi slt, %277, %280 : vector<1x256xi32>
    %282 = arith.andi %279, %281 : vector<1x256xi1>
    %cst_144 = arith.constant 0.000000e+00 : f32
    %283 = vector.shape_cast %282 : vector<1x256xi1> to vector<1x256xi1>
    %284 = vector.broadcast %283 : vector<1x256xi1> to vector<4x256xi1>
    %285 = vector.broadcast %cst_144 : f32 to vector<4x256xf32>
    %286 = arith.select %284, %275, %285 : vector<4x256xi1>, vector<4x256xf32>
    %287 = arith.truncf %286 : vector<4x256xf32> to vector<4x256xbf16>
    %c84 = arith.constant 84 : index
    %c0_145 = arith.constant 0 : index
    %288 = vector.load %arg7[%c84, %c0_145] : memref<100x512xbf16, #tpu.memory_space<vmem>>, vector<4x256xbf16>
    tpu.vector_store %arg7[%c84, %c0_145], %287 {strides = array<i32>} : memref<100x512xbf16, #tpu.memory_space<vmem>>, vector<4x256xbf16>,
    %c0_146 = arith.constant 0 : index
    %c0_147 = arith.constant 0 : index
    %c66 = arith.constant 66 : index
    %289 = vector.load %arg2[%c0_146, %c0_147, %c66] : memref<2x4x324xf32, #tpu.memory_space<vmem>>, vector<1x4x256xf32>
    %290 = vector.shape_cast %289 : vector<1x4x256xf32> to vector<4x256xf32>
    %291 = arith.truncf %290 : vector<4x256xf32> to vector<4x256xbf16>
    %c88 = arith.constant 88 : index
    %c0_148 = arith.constant 0 : index
    %292 = vector.load %arg7[%c88, %c0_148] : memref<100x512xbf16, #tpu.memory_space<vmem>>, vector<4x256xbf16>
    tpu.vector_store %arg7[%c88, %c0_148], %291 {strides = array<i32>} : memref<100x512xbf16, #tpu.memory_space<vmem>>, vector<4x256xbf16>,
    %c0_149 = arith.constant 0 : index
    %c0_150 = arith.constant 0 : index
    %c67 = arith.constant 67 : index
    %293 = vector.load %arg2[%c0_149, %c0_150, %c67] : memref<2x4x324xf32, #tpu.memory_space<vmem>>, vector<1x4x256xf32>
    %294 = vector.shape_cast %293 : vector<1x4x256xf32> to vector<4x256xf32>
    %c1_i32_151 = arith.constant 1 : i32
    %295 = vector.broadcast %c1_i32_151 : i32 to vector<1x256xi32>
    %296 = arith.addi %0, %295 : vector<1x256xi32>
    %c0_i32_152 = arith.constant 0 : i32
    %297 = vector.broadcast %c0_i32_152 : i32 to vector<1x256xi32>
    %298 = arith.cmpi sge, %296, %297 : vector<1x256xi32>
    %c16_i32_153 = arith.constant 16 : i32
    %299 = vector.broadcast %c16_i32_153 : i32 to vector<1x256xi32>
    %300 = arith.cmpi slt, %296, %299 : vector<1x256xi32>
    %301 = arith.andi %298, %300 : vector<1x256xi1>
    %cst_154 = arith.constant 0.000000e+00 : f32
    %302 = vector.shape_cast %301 : vector<1x256xi1> to vector<1x256xi1>
    %303 = vector.broadcast %302 : vector<1x256xi1> to vector<4x256xi1>
    %304 = vector.broadcast %cst_154 : f32 to vector<4x256xf32>
    %305 = arith.select %303, %294, %304 : vector<4x256xi1>, vector<4x256xf32>
    %306 = arith.truncf %305 : vector<4x256xf32> to vector<4x256xbf16>
    %c92 = arith.constant 92 : index
    %c0_155 = arith.constant 0 : index
    %307 = vector.load %arg7[%c92, %c0_155] : memref<100x512xbf16, #tpu.memory_space<vmem>>, vector<4x256xbf16>
    tpu.vector_store %arg7[%c92, %c0_155], %306 {strides = array<i32>} : memref<100x512xbf16, #tpu.memory_space<vmem>>, vector<4x256xbf16>,
    %c0_156 = arith.constant 0 : index
    %c0_157 = arith.constant 0 : index
    %c68_158 = arith.constant 68 : index
    %308 = vector.load %arg2[%c0_156, %c0_157, %c68_158] : memref<2x4x324xf32, #tpu.memory_space<vmem>>, vector<1x4x256xf32>
    %309 = vector.shape_cast %308 : vector<1x4x256xf32> to vector<4x256xf32>
    %c2_i32_159 = arith.constant 2 : i32
    %310 = vector.broadcast %c2_i32_159 : i32 to vector<1x256xi32>
    %311 = arith.addi %0, %310 : vector<1x256xi32>
    %c0_i32_160 = arith.constant 0 : i32
    %312 = vector.broadcast %c0_i32_160 : i32 to vector<1x256xi32>
    %313 = arith.cmpi sge, %311, %312 : vector<1x256xi32>
    %c16_i32_161 = arith.constant 16 : i32
    %314 = vector.broadcast %c16_i32_161 : i32 to vector<1x256xi32>
    %315 = arith.cmpi slt, %311, %314 : vector<1x256xi32>
    %316 = arith.andi %313, %315 : vector<1x256xi1>
    %cst_162 = arith.constant 0.000000e+00 : f32
    %317 = vector.shape_cast %316 : vector<1x256xi1> to vector<1x256xi1>
    %318 = vector.broadcast %317 : vector<1x256xi1> to vector<4x256xi1>
    %319 = vector.broadcast %cst_162 : f32 to vector<4x256xf32>
    %320 = arith.select %318, %309, %319 : vector<4x256xi1>, vector<4x256xf32>
    %321 = arith.truncf %320 : vector<4x256xf32> to vector<4x256xbf16>
    %c96 = arith.constant 96 : index
    %c0_163 = arith.constant 0 : index
    %322 = vector.load %arg7[%c96, %c0_163] : memref<100x512xbf16, #tpu.memory_space<vmem>>, vector<4x256xbf16>
    tpu.vector_store %arg7[%c96, %c0_163], %321 {strides = array<i32>} : memref<100x512xbf16, #tpu.memory_space<vmem>>, vector<4x256xbf16>,
    %c1_164 = arith.constant 1 : index
    %c0_165 = arith.constant 0 : index
    %c0_166 = arith.constant 0 : index
    %323 = vector.load %arg2[%c1_164, %c0_165, %c0_166] : memref<2x4x324xf32, #tpu.memory_space<vmem>>, vector<1x4x256xf32>
    %324 = vector.shape_cast %323 : vector<1x4x256xf32> to vector<4x256xf32>
    %c-2_i32_167 = arith.constant -2 : i32
    %325 = vector.broadcast %c-2_i32_167 : i32 to vector<1x256xi32>
    %326 = arith.addi %0, %325 : vector<1x256xi32>
    %c0_i32_168 = arith.constant 0 : i32
    %327 = vector.broadcast %c0_i32_168 : i32 to vector<1x256xi32>
    %328 = arith.cmpi sge, %326, %327 : vector<1x256xi32>
    %c16_i32_169 = arith.constant 16 : i32
    %329 = vector.broadcast %c16_i32_169 : i32 to vector<1x256xi32>
    %330 = arith.cmpi slt, %326, %329 : vector<1x256xi32>
    %331 = arith.andi %328, %330 : vector<1x256xi1>
    %cst_170 = arith.constant 0.000000e+00 : f32
    %332 = vector.shape_cast %331 : vector<1x256xi1> to vector<1x256xi1>
    %333 = vector.broadcast %332 : vector<1x256xi1> to vector<4x256xi1>
    %334 = vector.broadcast %cst_170 : f32 to vector<4x256xf32>
    %335 = arith.select %333, %324, %334 : vector<4x256xi1>, vector<4x256xf32>
    %336 = arith.truncf %335 : vector<4x256xf32> to vector<4x256xbf16>
    %c0_171 = arith.constant 0 : index
    %c256 = arith.constant 256 : index
    %337 = vector.load %arg7[%c0_171, %c256] : memref<100x512xbf16, #tpu.memory_space<vmem>>, vector<4x256xbf16>
    tpu.vector_store %arg7[%c0_171, %c256], %336 {strides = array<i32>} : memref<100x512xbf16, #tpu.memory_space<vmem>>, vector<4x256xbf16>,
    %c1_172 = arith.constant 1 : index
    %c0_173 = arith.constant 0 : index
    %c1_174 = arith.constant 1 : index
    %338 = vector.load %arg2[%c1_172, %c0_173, %c1_174] : memref<2x4x324xf32, #tpu.memory_space<vmem>>, vector<1x4x256xf32>
    %339 = vector.shape_cast %338 : vector<1x4x256xf32> to vector<4x256xf32>
    %c-1_i32_175 = arith.constant -1 : i32
    %340 = vector.broadcast %c-1_i32_175 : i32 to vector<1x256xi32>
    %341 = arith.addi %0, %340 : vector<1x256xi32>
    %c0_i32_176 = arith.constant 0 : i32
    %342 = vector.broadcast %c0_i32_176 : i32 to vector<1x256xi32>
    %343 = arith.cmpi sge, %341, %342 : vector<1x256xi32>
    %c16_i32_177 = arith.constant 16 : i32
    %344 = vector.broadcast %c16_i32_177 : i32 to vector<1x256xi32>
    %345 = arith.cmpi slt, %341, %344 : vector<1x256xi32>
    %346 = arith.andi %343, %345 : vector<1x256xi1>
    %cst_178 = arith.constant 0.000000e+00 : f32
    %347 = vector.shape_cast %346 : vector<1x256xi1> to vector<1x256xi1>
    %348 = vector.broadcast %347 : vector<1x256xi1> to vector<4x256xi1>
    %349 = vector.broadcast %cst_178 : f32 to vector<4x256xf32>
    %350 = arith.select %348, %339, %349 : vector<4x256xi1>, vector<4x256xf32>
    %351 = arith.truncf %350 : vector<4x256xf32> to vector<4x256xbf16>
    %c4_179 = arith.constant 4 : index
    %c256_180 = arith.constant 256 : index
    %352 = vector.load %arg7[%c4_179, %c256_180] : memref<100x512xbf16, #tpu.memory_space<vmem>>, vector<4x256xbf16>
    tpu.vector_store %arg7[%c4_179, %c256_180], %351 {strides = array<i32>} : memref<100x512xbf16, #tpu.memory_space<vmem>>, vector<4x256xbf16>,
    %c1_181 = arith.constant 1 : index
    %c0_182 = arith.constant 0 : index
    %c2_183 = arith.constant 2 : index
    %353 = vector.load %arg2[%c1_181, %c0_182, %c2_183] : memref<2x4x324xf32, #tpu.memory_space<vmem>>, vector<1x4x256xf32>
    %354 = vector.shape_cast %353 : vector<1x4x256xf32> to vector<4x256xf32>
    %355 = arith.truncf %354 : vector<4x256xf32> to vector<4x256xbf16>
    %c8_184 = arith.constant 8 : index
    %c256_185 = arith.constant 256 : index
    %356 = vector.load %arg7[%c8_184, %c256_185] : memref<100x512xbf16, #tpu.memory_space<vmem>>, vector<4x256xbf16>
    tpu.vector_store %arg7[%c8_184, %c256_185], %355 {strides = array<i32>} : memref<100x512xbf16, #tpu.memory_space<vmem>>, vector<4x256xbf16>,
    %c1_186 = arith.constant 1 : index
    %c0_187 = arith.constant 0 : index
    %c3_188 = arith.constant 3 : index
    %357 = vector.load %arg2[%c1_186, %c0_187, %c3_188] : memref<2x4x324xf32, #tpu.memory_space<vmem>>, vector<1x4x256xf32>
    %358 = vector.shape_cast %357 : vector<1x4x256xf32> to vector<4x256xf32>
    %c1_i32_189 = arith.constant 1 : i32
    %359 = vector.broadcast %c1_i32_189 : i32 to vector<1x256xi32>
    %360 = arith.addi %0, %359 : vector<1x256xi32>
    %c0_i32_190 = arith.constant 0 : i32
    %361 = vector.broadcast %c0_i32_190 : i32 to vector<1x256xi32>
    %362 = arith.cmpi sge, %360, %361 : vector<1x256xi32>
    %c16_i32_191 = arith.constant 16 : i32
    %363 = vector.broadcast %c16_i32_191 : i32 to vector<1x256xi32>
    %364 = arith.cmpi slt, %360, %363 : vector<1x256xi32>
    %365 = arith.andi %362, %364 : vector<1x256xi1>
    %cst_192 = arith.constant 0.000000e+00 : f32
    %366 = vector.shape_cast %365 : vector<1x256xi1> to vector<1x256xi1>
    %367 = vector.broadcast %366 : vector<1x256xi1> to vector<4x256xi1>
    %368 = vector.broadcast %cst_192 : f32 to vector<4x256xf32>
    %369 = arith.select %367, %358, %368 : vector<4x256xi1>, vector<4x256xf32>
    %370 = arith.truncf %369 : vector<4x256xf32> to vector<4x256xbf16>
    %c12_193 = arith.constant 12 : index
    %c256_194 = arith.constant 256 : index
    %371 = vector.load %arg7[%c12_193, %c256_194] : memref<100x512xbf16, #tpu.memory_space<vmem>>, vector<4x256xbf16>
    tpu.vector_store %arg7[%c12_193, %c256_194], %370 {strides = array<i32>} : memref<100x512xbf16, #tpu.memory_space<vmem>>, vector<4x256xbf16>,
    %c1_195 = arith.constant 1 : index
    %c0_196 = arith.constant 0 : index
    %c4_197 = arith.constant 4 : index
    %372 = vector.load %arg2[%c1_195, %c0_196, %c4_197] : memref<2x4x324xf32, #tpu.memory_space<vmem>>, vector<1x4x256xf32>
    %373 = vector.shape_cast %372 : vector<1x4x256xf32> to vector<4x256xf32>
    %c2_i32_198 = arith.constant 2 : i32
    %374 = vector.broadcast %c2_i32_198 : i32 to vector<1x256xi32>
    %375 = arith.addi %0, %374 : vector<1x256xi32>
    %c0_i32_199 = arith.constant 0 : i32
    %376 = vector.broadcast %c0_i32_199 : i32 to vector<1x256xi32>
    %377 = arith.cmpi sge, %375, %376 : vector<1x256xi32>
    %c16_i32_200 = arith.constant 16 : i32
    %378 = vector.broadcast %c16_i32_200 : i32 to vector<1x256xi32>
    %379 = arith.cmpi slt, %375, %378 : vector<1x256xi32>
    %380 = arith.andi %377, %379 : vector<1x256xi1>
    %cst_201 = arith.constant 0.000000e+00 : f32
    %381 = vector.shape_cast %380 : vector<1x256xi1> to vector<1x256xi1>
    %382 = vector.broadcast %381 : vector<1x256xi1> to vector<4x256xi1>
    %383 = vector.broadcast %cst_201 : f32 to vector<4x256xf32>
    %384 = arith.select %382, %373, %383 : vector<4x256xi1>, vector<4x256xf32>
    %385 = arith.truncf %384 : vector<4x256xf32> to vector<4x256xbf16>
    %c16_202 = arith.constant 16 : index
    %c256_203 = arith.constant 256 : index
    %386 = vector.load %arg7[%c16_202, %c256_203] : memref<100x512xbf16, #tpu.memory_space<vmem>>, vector<4x256xbf16>
    tpu.vector_store %arg7[%c16_202, %c256_203], %385 {strides = array<i32>} : memref<100x512xbf16, #tpu.memory_space<vmem>>, vector<4x256xbf16>,
    %c1_204 = arith.constant 1 : index
    %c0_205 = arith.constant 0 : index
    %c16_206 = arith.constant 16 : index
    %387 = vector.load %arg2[%c1_204, %c0_205, %c16_206] : memref<2x4x324xf32, #tpu.memory_space<vmem>>, vector<1x4x256xf32>
    %388 = vector.shape_cast %387 : vector<1x4x256xf32> to vector<4x256xf32>
    %c-2_i32_207 = arith.constant -2 : i32
    %389 = vector.broadcast %c-2_i32_207 : i32 to vector<1x256xi32>
    %390 = arith.addi %0, %389 : vector<1x256xi32>
    %c0_i32_208 = arith.constant 0 : i32
    %391 = vector.broadcast %c0_i32_208 : i32 to vector<1x256xi32>
    %392 = arith.cmpi sge, %390, %391 : vector<1x256xi32>
    %c16_i32_209 = arith.constant 16 : i32
    %393 = vector.broadcast %c16_i32_209 : i32 to vector<1x256xi32>
    %394 = arith.cmpi slt, %390, %393 : vector<1x256xi32>
    %395 = arith.andi %392, %394 : vector<1x256xi1>
    %cst_210 = arith.constant 0.000000e+00 : f32
    %396 = vector.shape_cast %395 : vector<1x256xi1> to vector<1x256xi1>
    %397 = vector.broadcast %396 : vector<1x256xi1> to vector<4x256xi1>
    %398 = vector.broadcast %cst_210 : f32 to vector<4x256xf32>
    %399 = arith.select %397, %388, %398 : vector<4x256xi1>, vector<4x256xf32>
    %400 = arith.truncf %399 : vector<4x256xf32> to vector<4x256xbf16>
    %c20_211 = arith.constant 20 : index
    %c256_212 = arith.constant 256 : index
    %401 = vector.load %arg7[%c20_211, %c256_212] : memref<100x512xbf16, #tpu.memory_space<vmem>>, vector<4x256xbf16>
    tpu.vector_store %arg7[%c20_211, %c256_212], %400 {strides = array<i32>} : memref<100x512xbf16, #tpu.memory_space<vmem>>, vector<4x256xbf16>,
    %c1_213 = arith.constant 1 : index
    %c0_214 = arith.constant 0 : index
    %c17_215 = arith.constant 17 : index
    %402 = vector.load %arg2[%c1_213, %c0_214, %c17_215] : memref<2x4x324xf32, #tpu.memory_space<vmem>>, vector<1x4x256xf32>
    %403 = vector.shape_cast %402 : vector<1x4x256xf32> to vector<4x256xf32>
    %c-1_i32_216 = arith.constant -1 : i32
    %404 = vector.broadcast %c-1_i32_216 : i32 to vector<1x256xi32>
    %405 = arith.addi %0, %404 : vector<1x256xi32>
    %c0_i32_217 = arith.constant 0 : i32
    %406 = vector.broadcast %c0_i32_217 : i32 to vector<1x256xi32>
    %407 = arith.cmpi sge, %405, %406 : vector<1x256xi32>
    %c16_i32_218 = arith.constant 16 : i32
    %408 = vector.broadcast %c16_i32_218 : i32 to vector<1x256xi32>
    %409 = arith.cmpi slt, %405, %408 : vector<1x256xi32>
    %410 = arith.andi %407, %409 : vector<1x256xi1>
    %cst_219 = arith.constant 0.000000e+00 : f32
    %411 = vector.shape_cast %410 : vector<1x256xi1> to vector<1x256xi1>
    %412 = vector.broadcast %411 : vector<1x256xi1> to vector<4x256xi1>
    %413 = vector.broadcast %cst_219 : f32 to vector<4x256xf32>
    %414 = arith.select %412, %403, %413 : vector<4x256xi1>, vector<4x256xf32>
    %415 = arith.truncf %414 : vector<4x256xf32> to vector<4x256xbf16>
    %c24_220 = arith.constant 24 : index
    %c256_221 = arith.constant 256 : index
    %416 = vector.load %arg7[%c24_220, %c256_221] : memref<100x512xbf16, #tpu.memory_space<vmem>>, vector<4x256xbf16>
    tpu.vector_store %arg7[%c24_220, %c256_221], %415 {strides = array<i32>} : memref<100x512xbf16, #tpu.memory_space<vmem>>, vector<4x256xbf16>,
    %c1_222 = arith.constant 1 : index
    %c0_223 = arith.constant 0 : index
    %c18_224 = arith.constant 18 : index
    %417 = vector.load %arg2[%c1_222, %c0_223, %c18_224] : memref<2x4x324xf32, #tpu.memory_space<vmem>>, vector<1x4x256xf32>
    %418 = vector.shape_cast %417 : vector<1x4x256xf32> to vector<4x256xf32>
    %419 = arith.truncf %418 : vector<4x256xf32> to vector<4x256xbf16>
    %c28_225 = arith.constant 28 : index
    %c256_226 = arith.constant 256 : index
    %420 = vector.load %arg7[%c28_225, %c256_226] : memref<100x512xbf16, #tpu.memory_space<vmem>>, vector<4x256xbf16>
    tpu.vector_store %arg7[%c28_225, %c256_226], %419 {strides = array<i32>} : memref<100x512xbf16, #tpu.memory_space<vmem>>, vector<4x256xbf16>,
    %c1_227 = arith.constant 1 : index
    %c0_228 = arith.constant 0 : index
    %c19_229 = arith.constant 19 : index
    %421 = vector.load %arg2[%c1_227, %c0_228, %c19_229] : memref<2x4x324xf32, #tpu.memory_space<vmem>>, vector<1x4x256xf32>
    %422 = vector.shape_cast %421 : vector<1x4x256xf32> to vector<4x256xf32>
    %c1_i32_230 = arith.constant 1 : i32
    %423 = vector.broadcast %c1_i32_230 : i32 to vector<1x256xi32>
    %424 = arith.addi %0, %423 : vector<1x256xi32>
    %c0_i32_231 = arith.constant 0 : i32
    %425 = vector.broadcast %c0_i32_231 : i32 to vector<1x256xi32>
    %426 = arith.cmpi sge, %424, %425 : vector<1x256xi32>
    %c16_i32_232 = arith.constant 16 : i32
    %427 = vector.broadcast %c16_i32_232 : i32 to vector<1x256xi32>
    %428 = arith.cmpi slt, %424, %427 : vector<1x256xi32>
    %429 = arith.andi %426, %428 : vector<1x256xi1>
    %cst_233 = arith.constant 0.000000e+00 : f32
    %430 = vector.shape_cast %429 : vector<1x256xi1> to vector<1x256xi1>
    %431 = vector.broadcast %430 : vector<1x256xi1> to vector<4x256xi1>
    %432 = vector.broadcast %cst_233 : f32 to vector<4x256xf32>
    %433 = arith.select %431, %422, %432 : vector<4x256xi1>, vector<4x256xf32>
    %434 = arith.truncf %433 : vector<4x256xf32> to vector<4x256xbf16>
    %c32_234 = arith.constant 32 : index
    %c256_235 = arith.constant 256 : index
    %435 = vector.load %arg7[%c32_234, %c256_235] : memref<100x512xbf16, #tpu.memory_space<vmem>>, vector<4x256xbf16>
    tpu.vector_store %arg7[%c32_234, %c256_235], %434 {strides = array<i32>} : memref<100x512xbf16, #tpu.memory_space<vmem>>, vector<4x256xbf16>,
    %c1_236 = arith.constant 1 : index
    %c0_237 = arith.constant 0 : index
    %c20_238 = arith.constant 20 : index
    %436 = vector.load %arg2[%c1_236, %c0_237, %c20_238] : memref<2x4x324xf32, #tpu.memory_space<vmem>>, vector<1x4x256xf32>
    %437 = vector.shape_cast %436 : vector<1x4x256xf32> to vector<4x256xf32>
    %c2_i32_239 = arith.constant 2 : i32
    %438 = vector.broadcast %c2_i32_239 : i32 to vector<1x256xi32>
    %439 = arith.addi %0, %438 : vector<1x256xi32>
    %c0_i32_240 = arith.constant 0 : i32
    %440 = vector.broadcast %c0_i32_240 : i32 to vector<1x256xi32>
    %441 = arith.cmpi sge, %439, %440 : vector<1x256xi32>
    %c16_i32_241 = arith.constant 16 : i32
    %442 = vector.broadcast %c16_i32_241 : i32 to vector<1x256xi32>
    %443 = arith.cmpi slt, %439, %442 : vector<1x256xi32>
    %444 = arith.andi %441, %443 : vector<1x256xi1>
    %cst_242 = arith.constant 0.000000e+00 : f32
    %445 = vector.shape_cast %444 : vector<1x256xi1> to vector<1x256xi1>
    %446 = vector.broadcast %445 : vector<1x256xi1> to vector<4x256xi1>
    %447 = vector.broadcast %cst_242 : f32 to vector<4x256xf32>
    %448 = arith.select %446, %437, %447 : vector<4x256xi1>, vector<4x256xf32>
    %449 = arith.truncf %448 : vector<4x256xf32> to vector<4x256xbf16>
    %c36_243 = arith.constant 36 : index
    %c256_244 = arith.constant 256 : index
    %450 = vector.load %arg7[%c36_243, %c256_244] : memref<100x512xbf16, #tpu.memory_space<vmem>>, vector<4x256xbf16>
    tpu.vector_store %arg7[%c36_243, %c256_244], %449 {strides = array<i32>} : memref<100x512xbf16, #tpu.memory_space<vmem>>, vector<4x256xbf16>,
    %c1_245 = arith.constant 1 : index
    %c0_246 = arith.constant 0 : index
    %c32_247 = arith.constant 32 : index
    %451 = vector.load %arg2[%c1_245, %c0_246, %c32_247] : memref<2x4x324xf32, #tpu.memory_space<vmem>>, vector<1x4x256xf32>
    %452 = vector.shape_cast %451 : vector<1x4x256xf32> to vector<4x256xf32>
    %c-2_i32_248 = arith.constant -2 : i32
    %453 = vector.broadcast %c-2_i32_248 : i32 to vector<1x256xi32>
    %454 = arith.addi %0, %453 : vector<1x256xi32>
    %c0_i32_249 = arith.constant 0 : i32
    %455 = vector.broadcast %c0_i32_249 : i32 to vector<1x256xi32>
    %456 = arith.cmpi sge, %454, %455 : vector<1x256xi32>
    %c16_i32_250 = arith.constant 16 : i32
    %457 = vector.broadcast %c16_i32_250 : i32 to vector<1x256xi32>
    %458 = arith.cmpi slt, %454, %457 : vector<1x256xi32>
    %459 = arith.andi %456, %458 : vector<1x256xi1>
    %cst_251 = arith.constant 0.000000e+00 : f32
    %460 = vector.shape_cast %459 : vector<1x256xi1> to vector<1x256xi1>
    %461 = vector.broadcast %460 : vector<1x256xi1> to vector<4x256xi1>
    %462 = vector.broadcast %cst_251 : f32 to vector<4x256xf32>
    %463 = arith.select %461, %452, %462 : vector<4x256xi1>, vector<4x256xf32>
    %464 = arith.truncf %463 : vector<4x256xf32> to vector<4x256xbf16>
    %c40_252 = arith.constant 40 : index
    %c256_253 = arith.constant 256 : index
    %465 = vector.load %arg7[%c40_252, %c256_253] : memref<100x512xbf16, #tpu.memory_space<vmem>>, vector<4x256xbf16>
    tpu.vector_store %arg7[%c40_252, %c256_253], %464 {strides = array<i32>} : memref<100x512xbf16, #tpu.memory_space<vmem>>, vector<4x256xbf16>,
    %c1_254 = arith.constant 1 : index
    %c0_255 = arith.constant 0 : index
    %c33_256 = arith.constant 33 : index
    %466 = vector.load %arg2[%c1_254, %c0_255, %c33_256] : memref<2x4x324xf32, #tpu.memory_space<vmem>>, vector<1x4x256xf32>
    %467 = vector.shape_cast %466 : vector<1x4x256xf32> to vector<4x256xf32>
    %c-1_i32_257 = arith.constant -1 : i32
    %468 = vector.broadcast %c-1_i32_257 : i32 to vector<1x256xi32>
    %469 = arith.addi %0, %468 : vector<1x256xi32>
    %c0_i32_258 = arith.constant 0 : i32
    %470 = vector.broadcast %c0_i32_258 : i32 to vector<1x256xi32>
    %471 = arith.cmpi sge, %469, %470 : vector<1x256xi32>
    %c16_i32_259 = arith.constant 16 : i32
    %472 = vector.broadcast %c16_i32_259 : i32 to vector<1x256xi32>
    %473 = arith.cmpi slt, %469, %472 : vector<1x256xi32>
    %474 = arith.andi %471, %473 : vector<1x256xi1>
    %cst_260 = arith.constant 0.000000e+00 : f32
    %475 = vector.shape_cast %474 : vector<1x256xi1> to vector<1x256xi1>
    %476 = vector.broadcast %475 : vector<1x256xi1> to vector<4x256xi1>
    %477 = vector.broadcast %cst_260 : f32 to vector<4x256xf32>
    %478 = arith.select %476, %467, %477 : vector<4x256xi1>, vector<4x256xf32>
    %479 = arith.truncf %478 : vector<4x256xf32> to vector<4x256xbf16>
    %c44_261 = arith.constant 44 : index
    %c256_262 = arith.constant 256 : index
    %480 = vector.load %arg7[%c44_261, %c256_262] : memref<100x512xbf16, #tpu.memory_space<vmem>>, vector<4x256xbf16>
    tpu.vector_store %arg7[%c44_261, %c256_262], %479 {strides = array<i32>} : memref<100x512xbf16, #tpu.memory_space<vmem>>, vector<4x256xbf16>,
    %c1_263 = arith.constant 1 : index
    %c0_264 = arith.constant 0 : index
    %c34_265 = arith.constant 34 : index
    %481 = vector.load %arg2[%c1_263, %c0_264, %c34_265] : memref<2x4x324xf32, #tpu.memory_space<vmem>>, vector<1x4x256xf32>
    %482 = vector.shape_cast %481 : vector<1x4x256xf32> to vector<4x256xf32>
    %483 = arith.truncf %482 : vector<4x256xf32> to vector<4x256xbf16>
    %c48_266 = arith.constant 48 : index
    %c256_267 = arith.constant 256 : index
    %484 = vector.load %arg7[%c48_266, %c256_267] : memref<100x512xbf16, #tpu.memory_space<vmem>>, vector<4x256xbf16>
    tpu.vector_store %arg7[%c48_266, %c256_267], %483 {strides = array<i32>} : memref<100x512xbf16, #tpu.memory_space<vmem>>, vector<4x256xbf16>,
    %c1_268 = arith.constant 1 : index
    %c0_269 = arith.constant 0 : index
    %c35_270 = arith.constant 35 : index
    %485 = vector.load %arg2[%c1_268, %c0_269, %c35_270] : memref<2x4x324xf32, #tpu.memory_space<vmem>>, vector<1x4x256xf32>
    %486 = vector.shape_cast %485 : vector<1x4x256xf32> to vector<4x256xf32>
    %c1_i32_271 = arith.constant 1 : i32
    %487 = vector.broadcast %c1_i32_271 : i32 to vector<1x256xi32>
    %488 = arith.addi %0, %487 : vector<1x256xi32>
    %c0_i32_272 = arith.constant 0 : i32
    %489 = vector.broadcast %c0_i32_272 : i32 to vector<1x256xi32>
    %490 = arith.cmpi sge, %488, %489 : vector<1x256xi32>
    %c16_i32_273 = arith.constant 16 : i32
    %491 = vector.broadcast %c16_i32_273 : i32 to vector<1x256xi32>
    %492 = arith.cmpi slt, %488, %491 : vector<1x256xi32>
    %493 = arith.andi %490, %492 : vector<1x256xi1>
    %cst_274 = arith.constant 0.000000e+00 : f32
    %494 = vector.shape_cast %493 : vector<1x256xi1> to vector<1x256xi1>
    %495 = vector.broadcast %494 : vector<1x256xi1> to vector<4x256xi1>
    %496 = vector.broadcast %cst_274 : f32 to vector<4x256xf32>
    %497 = arith.select %495, %486, %496 : vector<4x256xi1>, vector<4x256xf32>
    %498 = arith.truncf %497 : vector<4x256xf32> to vector<4x256xbf16>
    %c52_275 = arith.constant 52 : index
    %c256_276 = arith.constant 256 : index
    %499 = vector.load %arg7[%c52_275, %c256_276] : memref<100x512xbf16, #tpu.memory_space<vmem>>, vector<4x256xbf16>
    tpu.vector_store %arg7[%c52_275, %c256_276], %498 {strides = array<i32>} : memref<100x512xbf16, #tpu.memory_space<vmem>>, vector<4x256xbf16>,
    %c1_277 = arith.constant 1 : index
    %c0_278 = arith.constant 0 : index
    %c36_279 = arith.constant 36 : index
    %500 = vector.load %arg2[%c1_277, %c0_278, %c36_279] : memref<2x4x324xf32, #tpu.memory_space<vmem>>, vector<1x4x256xf32>
    %501 = vector.shape_cast %500 : vector<1x4x256xf32> to vector<4x256xf32>
    %c2_i32_280 = arith.constant 2 : i32
    %502 = vector.broadcast %c2_i32_280 : i32 to vector<1x256xi32>
    %503 = arith.addi %0, %502 : vector<1x256xi32>
    %c0_i32_281 = arith.constant 0 : i32
    %504 = vector.broadcast %c0_i32_281 : i32 to vector<1x256xi32>
    %505 = arith.cmpi sge, %503, %504 : vector<1x256xi32>
    %c16_i32_282 = arith.constant 16 : i32
    %506 = vector.broadcast %c16_i32_282 : i32 to vector<1x256xi32>
    %507 = arith.cmpi slt, %503, %506 : vector<1x256xi32>
    %508 = arith.andi %505, %507 : vector<1x256xi1>
    %cst_283 = arith.constant 0.000000e+00 : f32
    %509 = vector.shape_cast %508 : vector<1x256xi1> to vector<1x256xi1>
    %510 = vector.broadcast %509 : vector<1x256xi1> to vector<4x256xi1>
    %511 = vector.broadcast %cst_283 : f32 to vector<4x256xf32>
    %512 = arith.select %510, %501, %511 : vector<4x256xi1>, vector<4x256xf32>
    %513 = arith.truncf %512 : vector<4x256xf32> to vector<4x256xbf16>
    %c56_284 = arith.constant 56 : index
    %c256_285 = arith.constant 256 : index
    %514 = vector.load %arg7[%c56_284, %c256_285] : memref<100x512xbf16, #tpu.memory_space<vmem>>, vector<4x256xbf16>
    tpu.vector_store %arg7[%c56_284, %c256_285], %513 {strides = array<i32>} : memref<100x512xbf16, #tpu.memory_space<vmem>>, vector<4x256xbf16>,
    %c1_286 = arith.constant 1 : index
    %c0_287 = arith.constant 0 : index
    %c48_288 = arith.constant 48 : index
    %515 = vector.load %arg2[%c1_286, %c0_287, %c48_288] : memref<2x4x324xf32, #tpu.memory_space<vmem>>, vector<1x4x256xf32>
    %516 = vector.shape_cast %515 : vector<1x4x256xf32> to vector<4x256xf32>
    %c-2_i32_289 = arith.constant -2 : i32
    %517 = vector.broadcast %c-2_i32_289 : i32 to vector<1x256xi32>
    %518 = arith.addi %0, %517 : vector<1x256xi32>
    %c0_i32_290 = arith.constant 0 : i32
    %519 = vector.broadcast %c0_i32_290 : i32 to vector<1x256xi32>
    %520 = arith.cmpi sge, %518, %519 : vector<1x256xi32>
    %c16_i32_291 = arith.constant 16 : i32
    %521 = vector.broadcast %c16_i32_291 : i32 to vector<1x256xi32>
    %522 = arith.cmpi slt, %518, %521 : vector<1x256xi32>
    %523 = arith.andi %520, %522 : vector<1x256xi1>
    %cst_292 = arith.constant 0.000000e+00 : f32
    %524 = vector.shape_cast %523 : vector<1x256xi1> to vector<1x256xi1>
    %525 = vector.broadcast %524 : vector<1x256xi1> to vector<4x256xi1>
    %526 = vector.broadcast %cst_292 : f32 to vector<4x256xf32>
    %527 = arith.select %525, %516, %526 : vector<4x256xi1>, vector<4x256xf32>
    %528 = arith.truncf %527 : vector<4x256xf32> to vector<4x256xbf16>
    %c60_293 = arith.constant 60 : index
    %c256_294 = arith.constant 256 : index
    %529 = vector.load %arg7[%c60_293, %c256_294] : memref<100x512xbf16, #tpu.memory_space<vmem>>, vector<4x256xbf16>
    tpu.vector_store %arg7[%c60_293, %c256_294], %528 {strides = array<i32>} : memref<100x512xbf16, #tpu.memory_space<vmem>>, vector<4x256xbf16>,
    %c1_295 = arith.constant 1 : index
    %c0_296 = arith.constant 0 : index
    %c49_297 = arith.constant 49 : index
    %530 = vector.load %arg2[%c1_295, %c0_296, %c49_297] : memref<2x4x324xf32, #tpu.memory_space<vmem>>, vector<1x4x256xf32>
    %531 = vector.shape_cast %530 : vector<1x4x256xf32> to vector<4x256xf32>
    %c-1_i32_298 = arith.constant -1 : i32
    %532 = vector.broadcast %c-1_i32_298 : i32 to vector<1x256xi32>
    %533 = arith.addi %0, %532 : vector<1x256xi32>
    %c0_i32_299 = arith.constant 0 : i32
    %534 = vector.broadcast %c0_i32_299 : i32 to vector<1x256xi32>
    %535 = arith.cmpi sge, %533, %534 : vector<1x256xi32>
    %c16_i32_300 = arith.constant 16 : i32
    %536 = vector.broadcast %c16_i32_300 : i32 to vector<1x256xi32>
    %537 = arith.cmpi slt, %533, %536 : vector<1x256xi32>
    %538 = arith.andi %535, %537 : vector<1x256xi1>
    %cst_301 = arith.constant 0.000000e+00 : f32
    %539 = vector.shape_cast %538 : vector<1x256xi1> to vector<1x256xi1>
    %540 = vector.broadcast %539 : vector<1x256xi1> to vector<4x256xi1>
    %541 = vector.broadcast %cst_301 : f32 to vector<4x256xf32>
    %542 = arith.select %540, %531, %541 : vector<4x256xi1>, vector<4x256xf32>
    %543 = arith.truncf %542 : vector<4x256xf32> to vector<4x256xbf16>
    %c64_302 = arith.constant 64 : index
    %c256_303 = arith.constant 256 : index
    %544 = vector.load %arg7[%c64_302, %c256_303] : memref<100x512xbf16, #tpu.memory_space<vmem>>, vector<4x256xbf16>
    tpu.vector_store %arg7[%c64_302, %c256_303], %543 {strides = array<i32>} : memref<100x512xbf16, #tpu.memory_space<vmem>>, vector<4x256xbf16>,
    %c1_304 = arith.constant 1 : index
    %c0_305 = arith.constant 0 : index
    %c50_306 = arith.constant 50 : index
    %545 = vector.load %arg2[%c1_304, %c0_305, %c50_306] : memref<2x4x324xf32, #tpu.memory_space<vmem>>, vector<1x4x256xf32>
    %546 = vector.shape_cast %545 : vector<1x4x256xf32> to vector<4x256xf32>
    %547 = arith.truncf %546 : vector<4x256xf32> to vector<4x256xbf16>
    %c68_307 = arith.constant 68 : index
    %c256_308 = arith.constant 256 : index
    %548 = vector.load %arg7[%c68_307, %c256_308] : memref<100x512xbf16, #tpu.memory_space<vmem>>, vector<4x256xbf16>
    tpu.vector_store %arg7[%c68_307, %c256_308], %547 {strides = array<i32>} : memref<100x512xbf16, #tpu.memory_space<vmem>>, vector<4x256xbf16>,
    %c1_309 = arith.constant 1 : index
    %c0_310 = arith.constant 0 : index
    %c51_311 = arith.constant 51 : index
    %549 = vector.load %arg2[%c1_309, %c0_310, %c51_311] : memref<2x4x324xf32, #tpu.memory_space<vmem>>, vector<1x4x256xf32>
    %550 = vector.shape_cast %549 : vector<1x4x256xf32> to vector<4x256xf32>
    %c1_i32_312 = arith.constant 1 : i32
    %551 = vector.broadcast %c1_i32_312 : i32 to vector<1x256xi32>
    %552 = arith.addi %0, %551 : vector<1x256xi32>
    %c0_i32_313 = arith.constant 0 : i32
    %553 = vector.broadcast %c0_i32_313 : i32 to vector<1x256xi32>
    %554 = arith.cmpi sge, %552, %553 : vector<1x256xi32>
    %c16_i32_314 = arith.constant 16 : i32
    %555 = vector.broadcast %c16_i32_314 : i32 to vector<1x256xi32>
    %556 = arith.cmpi slt, %552, %555 : vector<1x256xi32>
    %557 = arith.andi %554, %556 : vector<1x256xi1>
    %cst_315 = arith.constant 0.000000e+00 : f32
    %558 = vector.shape_cast %557 : vector<1x256xi1> to vector<1x256xi1>
    %559 = vector.broadcast %558 : vector<1x256xi1> to vector<4x256xi1>
    %560 = vector.broadcast %cst_315 : f32 to vector<4x256xf32>
    %561 = arith.select %559, %550, %560 : vector<4x256xi1>, vector<4x256xf32>
    %562 = arith.truncf %561 : vector<4x256xf32> to vector<4x256xbf16>
    %c72_316 = arith.constant 72 : index
    %c256_317 = arith.constant 256 : index
    %563 = vector.load %arg7[%c72_316, %c256_317] : memref<100x512xbf16, #tpu.memory_space<vmem>>, vector<4x256xbf16>
    tpu.vector_store %arg7[%c72_316, %c256_317], %562 {strides = array<i32>} : memref<100x512xbf16, #tpu.memory_space<vmem>>, vector<4x256xbf16>,
    %c1_318 = arith.constant 1 : index
    %c0_319 = arith.constant 0 : index
    %c52_320 = arith.constant 52 : index
    %564 = vector.load %arg2[%c1_318, %c0_319, %c52_320] : memref<2x4x324xf32, #tpu.memory_space<vmem>>, vector<1x4x256xf32>
    %565 = vector.shape_cast %564 : vector<1x4x256xf32> to vector<4x256xf32>
    %c2_i32_321 = arith.constant 2 : i32
    %566 = vector.broadcast %c2_i32_321 : i32 to vector<1x256xi32>
    %567 = arith.addi %0, %566 : vector<1x256xi32>
    %c0_i32_322 = arith.constant 0 : i32
    %568 = vector.broadcast %c0_i32_322 : i32 to vector<1x256xi32>
    %569 = arith.cmpi sge, %567, %568 : vector<1x256xi32>
    %c16_i32_323 = arith.constant 16 : i32
    %570 = vector.broadcast %c16_i32_323 : i32 to vector<1x256xi32>
    %571 = arith.cmpi slt, %567, %570 : vector<1x256xi32>
    %572 = arith.andi %569, %571 : vector<1x256xi1>
    %cst_324 = arith.constant 0.000000e+00 : f32
    %573 = vector.shape_cast %572 : vector<1x256xi1> to vector<1x256xi1>
    %574 = vector.broadcast %573 : vector<1x256xi1> to vector<4x256xi1>
    %575 = vector.broadcast %cst_324 : f32 to vector<4x256xf32>
    %576 = arith.select %574, %565, %575 : vector<4x256xi1>, vector<4x256xf32>
    %577 = arith.truncf %576 : vector<4x256xf32> to vector<4x256xbf16>
    %c76_325 = arith.constant 76 : index
    %c256_326 = arith.constant 256 : index
    %578 = vector.load %arg7[%c76_325, %c256_326] : memref<100x512xbf16, #tpu.memory_space<vmem>>, vector<4x256xbf16>
    tpu.vector_store %arg7[%c76_325, %c256_326], %577 {strides = array<i32>} : memref<100x512xbf16, #tpu.memory_space<vmem>>, vector<4x256xbf16>,
    %c1_327 = arith.constant 1 : index
    %c0_328 = arith.constant 0 : index
    %c64_329 = arith.constant 64 : index
    %579 = vector.load %arg2[%c1_327, %c0_328, %c64_329] : memref<2x4x324xf32, #tpu.memory_space<vmem>>, vector<1x4x256xf32>
    %580 = vector.shape_cast %579 : vector<1x4x256xf32> to vector<4x256xf32>
    %c-2_i32_330 = arith.constant -2 : i32
    %581 = vector.broadcast %c-2_i32_330 : i32 to vector<1x256xi32>
    %582 = arith.addi %0, %581 : vector<1x256xi32>
    %c0_i32_331 = arith.constant 0 : i32
    %583 = vector.broadcast %c0_i32_331 : i32 to vector<1x256xi32>
    %584 = arith.cmpi sge, %582, %583 : vector<1x256xi32>
    %c16_i32_332 = arith.constant 16 : i32
    %585 = vector.broadcast %c16_i32_332 : i32 to vector<1x256xi32>
    %586 = arith.cmpi slt, %582, %585 : vector<1x256xi32>
    %587 = arith.andi %584, %586 : vector<1x256xi1>
    %cst_333 = arith.constant 0.000000e+00 : f32
    %588 = vector.shape_cast %587 : vector<1x256xi1> to vector<1x256xi1>
    %589 = vector.broadcast %588 : vector<1x256xi1> to vector<4x256xi1>
    %590 = vector.broadcast %cst_333 : f32 to vector<4x256xf32>
    %591 = arith.select %589, %580, %590 : vector<4x256xi1>, vector<4x256xf32>
    %592 = arith.truncf %591 : vector<4x256xf32> to vector<4x256xbf16>
    %c80_334 = arith.constant 80 : index
    %c256_335 = arith.constant 256 : index
    %593 = vector.load %arg7[%c80_334, %c256_335] : memref<100x512xbf16, #tpu.memory_space<vmem>>, vector<4x256xbf16>
    tpu.vector_store %arg7[%c80_334, %c256_335], %592 {strides = array<i32>} : memref<100x512xbf16, #tpu.memory_space<vmem>>, vector<4x256xbf16>,
    %c1_336 = arith.constant 1 : index
    %c0_337 = arith.constant 0 : index
    %c65_338 = arith.constant 65 : index
    %594 = vector.load %arg2[%c1_336, %c0_337, %c65_338] : memref<2x4x324xf32, #tpu.memory_space<vmem>>, vector<1x4x256xf32>
    %595 = vector.shape_cast %594 : vector<1x4x256xf32> to vector<4x256xf32>
    %c-1_i32_339 = arith.constant -1 : i32
    %596 = vector.broadcast %c-1_i32_339 : i32 to vector<1x256xi32>
    %597 = arith.addi %0, %596 : vector<1x256xi32>
    %c0_i32_340 = arith.constant 0 : i32
    %598 = vector.broadcast %c0_i32_340 : i32 to vector<1x256xi32>
    %599 = arith.cmpi sge, %597, %598 : vector<1x256xi32>
    %c16_i32_341 = arith.constant 16 : i32
    %600 = vector.broadcast %c16_i32_341 : i32 to vector<1x256xi32>
    %601 = arith.cmpi slt, %597, %600 : vector<1x256xi32>
    %602 = arith.andi %599, %601 : vector<1x256xi1>
    %cst_342 = arith.constant 0.000000e+00 : f32
    %603 = vector.shape_cast %602 : vector<1x256xi1> to vector<1x256xi1>
    %604 = vector.broadcast %603 : vector<1x256xi1> to vector<4x256xi1>
    %605 = vector.broadcast %cst_342 : f32 to vector<4x256xf32>
    %606 = arith.select %604, %595, %605 : vector<4x256xi1>, vector<4x256xf32>
    %607 = arith.truncf %606 : vector<4x256xf32> to vector<4x256xbf16>
    %c84_343 = arith.constant 84 : index
    %c256_344 = arith.constant 256 : index
    %608 = vector.load %arg7[%c84_343, %c256_344] : memref<100x512xbf16, #tpu.memory_space<vmem>>, vector<4x256xbf16>
    tpu.vector_store %arg7[%c84_343, %c256_344], %607 {strides = array<i32>} : memref<100x512xbf16, #tpu.memory_space<vmem>>, vector<4x256xbf16>,
    %c1_345 = arith.constant 1 : index
    %c0_346 = arith.constant 0 : index
    %c66_347 = arith.constant 66 : index
    %609 = vector.load %arg2[%c1_345, %c0_346, %c66_347] : memref<2x4x324xf32, #tpu.memory_space<vmem>>, vector<1x4x256xf32>
    %610 = vector.shape_cast %609 : vector<1x4x256xf32> to vector<4x256xf32>
    %611 = arith.truncf %610 : vector<4x256xf32> to vector<4x256xbf16>
    %c88_348 = arith.constant 88 : index
    %c256_349 = arith.constant 256 : index
    %612 = vector.load %arg7[%c88_348, %c256_349] : memref<100x512xbf16, #tpu.memory_space<vmem>>, vector<4x256xbf16>
    tpu.vector_store %arg7[%c88_348, %c256_349], %611 {strides = array<i32>} : memref<100x512xbf16, #tpu.memory_space<vmem>>, vector<4x256xbf16>,
    %c1_350 = arith.constant 1 : index
    %c0_351 = arith.constant 0 : index
    %c67_352 = arith.constant 67 : index
    %613 = vector.load %arg2[%c1_350, %c0_351, %c67_352] : memref<2x4x324xf32, #tpu.memory_space<vmem>>, vector<1x4x256xf32>
    %614 = vector.shape_cast %613 : vector<1x4x256xf32> to vector<4x256xf32>
    %c1_i32_353 = arith.constant 1 : i32
    %615 = vector.broadcast %c1_i32_353 : i32 to vector<1x256xi32>
    %616 = arith.addi %0, %615 : vector<1x256xi32>
    %c0_i32_354 = arith.constant 0 : i32
    %617 = vector.broadcast %c0_i32_354 : i32 to vector<1x256xi32>
    %618 = arith.cmpi sge, %616, %617 : vector<1x256xi32>
    %c16_i32_355 = arith.constant 16 : i32
    %619 = vector.broadcast %c16_i32_355 : i32 to vector<1x256xi32>
    %620 = arith.cmpi slt, %616, %619 : vector<1x256xi32>
    %621 = arith.andi %618, %620 : vector<1x256xi1>
    %cst_356 = arith.constant 0.000000e+00 : f32
    %622 = vector.shape_cast %621 : vector<1x256xi1> to vector<1x256xi1>
    %623 = vector.broadcast %622 : vector<1x256xi1> to vector<4x256xi1>
    %624 = vector.broadcast %cst_356 : f32 to vector<4x256xf32>
    %625 = arith.select %623, %614, %624 : vector<4x256xi1>, vector<4x256xf32>
    %626 = arith.truncf %625 : vector<4x256xf32> to vector<4x256xbf16>
    %c92_357 = arith.constant 92 : index
    %c256_358 = arith.constant 256 : index
    %627 = vector.load %arg7[%c92_357, %c256_358] : memref<100x512xbf16, #tpu.memory_space<vmem>>, vector<4x256xbf16>
    tpu.vector_store %arg7[%c92_357, %c256_358], %626 {strides = array<i32>} : memref<100x512xbf16, #tpu.memory_space<vmem>>, vector<4x256xbf16>,
    %c1_359 = arith.constant 1 : index
    %c0_360 = arith.constant 0 : index
    %c68_361 = arith.constant 68 : index
    %628 = vector.load %arg2[%c1_359, %c0_360, %c68_361] : memref<2x4x324xf32, #tpu.memory_space<vmem>>, vector<1x4x256xf32>
    %629 = vector.shape_cast %628 : vector<1x4x256xf32> to vector<4x256xf32>
    %c2_i32_362 = arith.constant 2 : i32
    %630 = vector.broadcast %c2_i32_362 : i32 to vector<1x256xi32>
    %631 = arith.addi %0, %630 : vector<1x256xi32>
    %c0_i32_363 = arith.constant 0 : i32
    %632 = vector.broadcast %c0_i32_363 : i32 to vector<1x256xi32>
    %633 = arith.cmpi sge, %631, %632 : vector<1x256xi32>
    %c16_i32_364 = arith.constant 16 : i32
    %634 = vector.broadcast %c16_i32_364 : i32 to vector<1x256xi32>
    %635 = arith.cmpi slt, %631, %634 : vector<1x256xi32>
    %636 = arith.andi %633, %635 : vector<1x256xi1>
    %cst_365 = arith.constant 0.000000e+00 : f32
    %637 = vector.shape_cast %636 : vector<1x256xi1> to vector<1x256xi1>
    %638 = vector.broadcast %637 : vector<1x256xi1> to vector<4x256xi1>
    %639 = vector.broadcast %cst_365 : f32 to vector<4x256xf32>
    %640 = arith.select %638, %629, %639 : vector<4x256xi1>, vector<4x256xf32>
    %641 = arith.truncf %640 : vector<4x256xf32> to vector<4x256xbf16>
    %c96_366 = arith.constant 96 : index
    %c256_367 = arith.constant 256 : index
    %642 = vector.load %arg7[%c96_366, %c256_367] : memref<100x512xbf16, #tpu.memory_space<vmem>>, vector<4x256xbf16>
    tpu.vector_store %arg7[%c96_366, %c256_367], %641 {strides = array<i32>} : memref<100x512xbf16, #tpu.memory_space<vmem>>, vector<4x256xbf16>,
    %c0_368 = arith.constant 0 : index
    %c0_369 = arith.constant 0 : index
    %643 = vector.load %arg7[%c0_368, %c0_369] : memref<100x512xbf16, #tpu.memory_space<vmem>>, vector<100x512xbf16>
    %cst_370 = arith.constant dense<0.000000e+00> : vector<8x512xf32>
    %644 = tpu.matmul %1, %643, %cst_370 {dimension_numbers = #tpu.dot_dimension_numbers<[1], [0], [0], [1], [0, 0, 1, 1], [], []>} : vector<8x100xbf16>, vector<100x512xbf16>, vector<8x512xf32> -> vector<8x512xf32>
    %645 = vector.broadcast %2 : vector<8x1xf32> to vector<8x512xf32>
    %646 = arith.addf %644, %645 : vector<8x512xf32>
    %cst_371 = arith.constant 0.000000e+00 : f32
    %647 = vector.broadcast %cst_371 : f32 to vector<8x512xf32>
    %648 = arith.maximumf %646, %647 : vector<8x512xf32>
    %c0_372 = arith.constant 0 : index
    %c0_373 = arith.constant 0 : index
    %c34_374 = arith.constant 34 : index
    %649 = vector.load %arg2[%c0_372, %c0_373, %c34_374] : memref<2x4x324xf32, #tpu.memory_space<vmem>>, vector<1x4x256xf32>
    %650 = vector.shape_cast %649 : vector<1x4x256xf32> to vector<4x256xf32>
    %c0_375 = arith.constant 0 : index
    %c0_376 = arith.constant 0 : index
    %c0_377 = arith.constant 0 : index
    %651 = vector.load %arg6[%c0_375, %c0_376, %c0_377] : memref<2x12x256xf32, #tpu.memory_space<vmem>>, vector<1x4x256xf32>
    %652 = vector.shape_cast %651 : vector<1x4x256xf32> to vector<4x256xf32>
    %653 = vector.shape_cast %650 : vector<4x256xf32> to vector<1x4x256xf32>
    tpu.vector_store %arg6[%c0_375, %c0_376, %c0_377], %653 {strides = array<i32>} : memref<2x12x256xf32, #tpu.memory_space<vmem>>, vector<1x4x256xf32>,
    %654 = vector.extract_strided_slice %648 {offsets = [0, 0], sizes = [8, 256], strides = [1, 1]} : vector<8x512xf32> to vector<8x256xf32>
    %c0_378 = arith.constant 0 : index
    %c4_379 = arith.constant 4 : index
    %c0_380 = arith.constant 0 : index
    %655 = vector.load %arg6[%c0_378, %c4_379, %c0_380] : memref<2x12x256xf32, #tpu.memory_space<vmem>>, vector<1x8x256xf32>
    %656 = vector.shape_cast %655 : vector<1x8x256xf32> to vector<8x256xf32>
    %657 = vector.shape_cast %654 : vector<8x256xf32> to vector<1x8x256xf32>
    tpu.vector_store %arg6[%c0_378, %c4_379, %c0_380], %657 {strides = array<i32>} : memref<2x12x256xf32, #tpu.memory_space<vmem>>, vector<1x8x256xf32>,
    %c1_381 = arith.constant 1 : index
    %c0_382 = arith.constant 0 : index
    %c34_383 = arith.constant 34 : index
    %658 = vector.load %arg2[%c1_381, %c0_382, %c34_383] : memref<2x4x324xf32, #tpu.memory_space<vmem>>, vector<1x4x256xf32>
    %659 = vector.shape_cast %658 : vector<1x4x256xf32> to vector<4x256xf32>
    %c1_384 = arith.constant 1 : index
    %c0_385 = arith.constant 0 : index
    %c0_386 = arith.constant 0 : index
    %660 = vector.load %arg6[%c1_384, %c0_385, %c0_386] : memref<2x12x256xf32, #tpu.memory_space<vmem>>, vector<1x4x256xf32>
    %661 = vector.shape_cast %660 : vector<1x4x256xf32> to vector<4x256xf32>
    %662 = vector.shape_cast %659 : vector<4x256xf32> to vector<1x4x256xf32>
    tpu.vector_store %arg6[%c1_384, %c0_385, %c0_386], %662 {strides = array<i32>} : memref<2x12x256xf32, #tpu.memory_space<vmem>>, vector<1x4x256xf32>,
    %663 = vector.extract_strided_slice %648 {offsets = [0, 256], sizes = [8, 256], strides = [1, 1]} : vector<8x512xf32> to vector<8x256xf32>
    %c1_387 = arith.constant 1 : index
    %c4_388 = arith.constant 4 : index
    %c0_389 = arith.constant 0 : index
    %664 = vector.load %arg6[%c1_387, %c4_388, %c0_389] : memref<2x12x256xf32, #tpu.memory_space<vmem>>, vector<1x8x256xf32>
    %665 = vector.shape_cast %664 : vector<1x8x256xf32> to vector<8x256xf32>
    %666 = vector.shape_cast %663 : vector<8x256xf32> to vector<1x8x256xf32>
    tpu.vector_store %arg6[%c1_387, %c4_388, %c0_389], %666 {strides = array<i32>} : memref<2x12x256xf32, #tpu.memory_space<vmem>>, vector<1x8x256xf32>,
    return
  }
  func.func @transform_0(%arg0: i32, %arg1: i32) -> (i32, i32, i32) {
    %c0_i32 = arith.constant 0 : i32
    %c0_i32_0 = arith.constant 0 : i32
    %c0_i32_1 = arith.constant 0 : i32
    return %arg0, %c0_i32, %c0_i32_0 : i32, i32, i32
  }
  func.func @transform_1(%arg0: i32, %arg1: i32) -> (i32, i32) {
    %c0_i32 = arith.constant 0 : i32
    %c0_i32_0 = arith.constant 0 : i32
    %c0_i32_1 = arith.constant 0 : i32
    return %c0_i32, %c0_i32_0 : i32, i32
  }
  func.func @transform_2(%arg0: i32, %arg1: i32) -> (i32, i32) {
    %c0_i32 = arith.constant 0 : i32
    %c0_i32_0 = arith.constant 0 : i32
    %c0_i32_1 = arith.constant 0 : i32
    return %c0_i32, %c0_i32_0 : i32, i32
  }
  func.func @transform_3(%arg0: i32, %arg1: i32) -> (i32, i32) {
    %c0_i32 = arith.constant 0 : i32
    %c0_i32_0 = arith.constant 0 : i32
    return %c0_i32, %arg1 : i32, i32
  }
  func.func @transform_4(%arg0: i32, %arg1: i32) -> (i32, i32, i32) {
    %c0_i32 = arith.constant 0 : i32
    %c0_i32_0 = arith.constant 0 : i32
    return %arg0, %c0_i32, %arg1 : i32, i32, i32
  }
}

</mosaic_0001>

<llo_original>
// kernel: dense_layer_forward.1
$region0: #{dense_layer_forward.1}
  #allocation0 [shape = 'u32[]', space=smem, size = 0x4, offset = 0x4, fixed_abs, tag = 'smem constant byte address 0x4 - core index']
  #allocation1 [shape = 'u32[144,128]{1,0:T(1,128)}', space=vmem, size = 0x12000, scoped, tag = 'internal scratch']
  #allocation2 [shape = 'bf16[100,512]{1,0:T(8,128)(2,1)}', space=vmem, size = 0x1a000, scoped, tag = 'scratch operand']
  %s0 = inlined_call_operand.vmem [shape: f32[2,4,324], index: 0, kind: input, shape index: {}]
  %s1 = inlined_call_operand.vmem [shape: bf16[8,100], index: 1, kind: input, shape index: {}]
  %s2 = inlined_call_operand.vmem [shape: f32[8,1], index: 2, kind: input, shape index: {}]
  %s3 = inlined_call_operand.vmem [shape: s32[1,256], index: 3, kind: input, shape index: {}]
  %s4 = inlined_call_operand.vmem [shape: f32[2,12,256], index: 4, kind: output, shape index: {}]
  %s5 = sld [smem:[#allocation0]]
  $region26: #{dense_layer_forward.1} parent=0
    _
  %s7 = ssub.s32 1, %s5
  %s8 = scalar_select 0, %s7, %s5
  // Predicated region
  $region2: #{dense_layer_forward.1} parent=0 // pred_check
    _
  $region3: #{dense_layer_forward.1} parent=0 // pred_check_branch
    %10 = sbr.rel (0) target = $region5
  $region4: #{dense_layer_forward.1} parent=0 // pred_region
    _
  $region5: #{dense_layer_forward.1} parent=0 // pred_fallthru
    _
  // Predicated region
  $region6: #{dense_layer_forward.1} parent=0 // pred_check
    _
  $region7: #{dense_layer_forward.1} parent=0 // pred_check_branch
    %12 = sbr.rel (0) target = $region9
  $region8: #{dense_layer_forward.1} parent=0 // pred_region
    _
  $region9: #{dense_layer_forward.1} parent=0 // pred_fallthru
    _
  // Predicated region
  $region10: #{dense_layer_forward.1} parent=0 // pred_check
    _
  $region11: #{dense_layer_forward.1} parent=0 // pred_check_branch
    %14 = sbr.rel (0) target = $region13
  $region12: #{dense_layer_forward.1} parent=0 // pred_region
    _
  $region13: #{dense_layer_forward.1} parent=0 // pred_fallthru
    _
  // Predicated region
  $region14: #{dense_layer_forward.1} parent=0 // pred_check
    _
  $region15: #{dense_layer_forward.1} parent=0 // pred_check_branch
    %16 = sbr.rel (0) target = $region17
  $region16: #{dense_layer_forward.1} parent=0 // pred_region
    _
  $region17: #{dense_layer_forward.1} parent=0 // pred_fallthru
    _
  %v18 = vld [vmem:[%s3] sm:$0x3]
  %v19 = vld [vmem:[%s1] sm:$0xf]
  %v20 = vld [vmem:[%s2] sm:$0xff]
  %v21 = vld [vmem:[%s0] sm:$0xff]
  %v22 = vadd.s32 %v18, 4294967294
  %vm23 = vcmp.ge.s32.totalorder %v22, 0
  %vm24 = vcmp.lt.s32.totalorder %v22, 16
  %vm25 = vmand %vm23, %vm24
  %v26 = vsel %vm25, 1, 0
  %v27 = vlaneseq
  %v28 = vshrl.u32 %v27, 7
  %v29 = vsub.s32 0, %v28
  %v30 = vrot.slane %v26, %v29
  %v31 = vlaneseq
  %v32 = vshrl.u32 %v31, 7
  %v33 = vsub.s32 1, %v32
  %v34 = vrot.slane %v26, %v33
  %vm35 = vcmp.eq.s32.totalorder %v30, 1
  %vm36 = vcmp.eq.s32.totalorder %v34, 1
  %v38 = vcombine.high %v21, %v21
  %v40 = vsel %vm35, %v21, 0.0
  %v41 = vsel %vm36, %v38, 0.0
  %v42 = vpack.c.bf16 %v40, %v40
  %v43 = vpack.c.bf16 %v41, %v41
  %v46 = vunpack.c.l.b16 %v42
  %v47 = vunpack.c.l.b16 %v43
  %v48 = vpack.c.b16 %v47, %v46
  %50 = vst [vmem:[#allocation2] sm:$0x33] %v48
  %v51 = vld [vmem:[%s0] sm:$0xff]
  %v52 = vld [vmem:[%s0 + $0x8] sm:$0xf]
  %v53 = vadd.s32 %v18, 4294967295
  %vm54 = vcmp.ge.s32.totalorder %v53, 0
  %vm55 = vcmp.lt.s32.totalorder %v53, 16
  %vm56 = vmand %vm54, %vm55
  %v57 = vsel %vm56, 1, 0
  %v58 = vlaneseq
  %v59 = vshrl.u32 %v58, 7
  %v60 = vsub.s32 0, %v59
  %v61 = vrot.slane %v57, %v60
  %v62 = vlaneseq
  %v63 = vshrl.u32 %v62, 7
  %v64 = vsub.s32 1, %v63
  %v65 = vrot.slane %v57, %v64
  %vm66 = vcmp.eq.s32.totalorder %v61, 1
  %vm67 = vcmp.eq.s32.totalorder %v65, 1
  %v70 = vcombine.high %v51, %v51
  %71 = vrot.lane.b32.xlu0 %v51, 127
  %v72 = vpop.permute.xlu0 %71
  %73 = vrot.lane.b32.xlu0 %v70, 127
  %v74 = vpop.permute.xlu0 %73
  %75 = vrot.lane.b32.xlu0 %v52, 127
  %v76 = vpop.permute.xlu0 %75
  %vm77 = vcmask 1039360
  %v78 = vsel %vm77, %v72, %v74
  %v79 = vsel %vm77, %v74, %v76
  %v82 = vsel %vm66, %v78, 0.0
  %v83 = vsel %vm67, %v79, 0.0
  %v84 = vpack.c.bf16 %v82, %v82
  %v85 = vpack.c.bf16 %v83, %v83
  %v88 = vunpack.c.l.b16 %v84
  %v89 = vunpack.c.l.b16 %v85
  %v90 = vpack.c.b16 %v89, %v88
  %v91 = vrot.slane %v90, 6
  %93 = vst [vmem:[#allocation2] sm:$0xcc] %v91
  %v94 = vld [vmem:[%s0] sm:$0xff]
  %v95 = vld [vmem:[%s0 + $0x8] sm:$0xf]
  %v97 = vcombine.high %v94, %v94
  %v99 = vpack.c.bf16 %v94, %v94
  %v100 = vpack.c.bf16 %v97, %v97
  %v101 = vpack.c.bf16 %v95, %v95
  %v105 = vunpack.c.l.b16 %v99
  %v106 = vunpack.c.l.b16 %v100
  %v107 = vunpack.c.l.b16 %v101
  %v108 = vpack.c.b16 %v106, %v105
  %v109 = vpack.c.b16 %v107, %v107
  %110 = vrot.lane.b32.xlu0 %v108, 126
  %v111 = vpop.permute.xlu0 %110
  %112 = vrot.lane.b32.xlu0 %v109, 126
  %v113 = vpop.permute.xlu0 %112
  %v114 = vrot.slane %v111, 4
  %v115 = vrot.slane %v113, 4
  %vm116 = vcmask 1043456
  %v117 = vsel %vm116, %v114, %v115
  %vm118 = vcmask 1031168
  %v119 = vsel %vm118, %v111, %v117
  %121 = vst [vmem:[#allocation2 + $0x10] sm:$0x33] %v119
  %v122 = vld [vmem:[%s0] sm:$0xff]
  %v123 = vld [vmem:[%s0 + $0x8] sm:$0xf]
  %v124 = vadd.s32 %v18, 1
  %vm125 = vcmp.ge.s32.totalorder %v124, 0
  %vm126 = vcmp.lt.s32.totalorder %v124, 16
  %vm127 = vmand %vm125, %vm126
  %v128 = vsel %vm127, 1, 0
  %v129 = vlaneseq
  %v130 = vshrl.u32 %v129, 7
  %v131 = vsub.s32 0, %v130
  %v132 = vrot.slane %v128, %v131
  %v133 = vlaneseq
  %v134 = vshrl.u32 %v133, 7
  %v135 = vsub.s32 1, %v134
  %v136 = vrot.slane %v128, %v135
  %vm137 = vcmp.eq.s32.totalorder %v132, 1
  %vm138 = vcmp.eq.s32.totalorder %v136, 1
  %v141 = vcombine.high %v122, %v122
  %142 = vrot.lane.b32.xlu0 %v122, 125
  %v143 = vpop.permute.xlu0 %142
  %144 = vrot.lane.b32.xlu0 %v141, 125
  %v145 = vpop.permute.xlu0 %144
  %146 = vrot.lane.b32.xlu0 %v123, 125
  %v147 = vpop.permute.xlu0 %146
  %vm148 = vcmask 1022976
  %v149 = vsel %vm148, %v143, %v145
  %v150 = vsel %vm148, %v145, %v147
  %v153 = vsel %vm137, %v149, 0.0
  %v154 = vsel %vm138, %v150, 0.0
  %v155 = vpack.c.bf16 %v153, %v153
  %v156 = vpack.c.bf16 %v154, %v154
  %v159 = vunpack.c.l.b16 %v155
  %v160 = vunpack.c.l.b16 %v156
  %v161 = vpack.c.b16 %v160, %v159
  %v162 = vrot.slane %v161, 6
  %164 = vst [vmem:[#allocation2 + $0x10] sm:$0xcc] %v162
  %v165 = vld [vmem:[%s0] sm:$0xff]
  %v166 = vld [vmem:[%s0 + $0x8] sm:$0xf]
  %v167 = vadd.s32 %v18, 2
  %vm168 = vcmp.ge.s32.totalorder %v167, 0
  %vm169 = vcmp.lt.s32.totalorder %v167, 16
  %vm170 = vmand %vm168, %vm169
  %v171 = vsel %vm170, 1, 0
  %v172 = vlaneseq
  %v173 = vshrl.u32 %v172, 7
  %v174 = vsub.s32 0, %v173
  %v175 = vrot.slane %v171, %v174
  %v176 = vlaneseq
  %v177 = vshrl.u32 %v176, 7
  %v178 = vsub.s32 1, %v177
  %v179 = vrot.slane %v171, %v178
  %vm180 = vcmp.eq.s32.totalorder %v175, 1
  %vm181 = vcmp.eq.s32.totalorder %v179, 1
  %v184 = vcombine.high %v165, %v165
  %185 = vrot.lane.b32.xlu0 %v165, 124
  %v186 = vpop.permute.xlu0 %185
  %187 = vrot.lane.b32.xlu0 %v184, 124
  %v188 = vpop.permute.xlu0 %187
  %189 = vrot.lane.b32.xlu0 %v166, 124
  %v190 = vpop.permute.xlu0 %189
  %vm191 = vcmask 1014784
  %v192 = vsel %vm191, %v186, %v188
  %v193 = vsel %vm191, %v188, %v190
  %v196 = vsel %vm180, %v192, 0.0
  %v197 = vsel %vm181, %v193, 0.0
  %v198 = vpack.c.bf16 %v196, %v196
  %v199 = vpack.c.bf16 %v197, %v197
  %v202 = vunpack.c.l.b16 %v198
  %v203 = vunpack.c.l.b16 %v199
  %v204 = vpack.c.b16 %v203, %v202
  %206 = vst [vmem:[#allocation2 + $0x20] sm:$0x33] %v204
  %v207 = vld [vmem:[%s0] sm:$0xff]
  %v208 = vld [vmem:[%s0 + $0x8] sm:$0xf]
  %v211 = vcombine.high %v207, %v207
  %212 = vrot.lane.b32.xlu0 %v207, 112
  %v213 = vpop.permute.xlu0 %212
  %214 = vrot.lane.b32.xlu0 %v211, 112
  %v215 = vpop.permute.xlu0 %214
  %216 = vrot.lane.b32.xlu0 %v208, 112
  %v217 = vpop.permute.xlu0 %216
  %vm218 = vcmask 916480
  %v219 = vsel %vm218, %v213, %v215
  %v220 = vsel %vm218, %v215, %v217
  %v223 = vsel %vm35, %v219, 0.0
  %v224 = vsel %vm36, %v220, 0.0
  %v225 = vpack.c.bf16 %v223, %v223
  %v226 = vpack.c.bf16 %v224, %v224
  %v229 = vunpack.c.l.b16 %v225
  %v230 = vunpack.c.l.b16 %v226
  %v231 = vpack.c.b16 %v230, %v229
  %v232 = vrot.slane %v231, 6
  %234 = vst [vmem:[#allocation2 + $0x20] sm:$0xcc] %v232
  %v235 = vld [vmem:[%s0] sm:$0xff]
  %v236 = vld [vmem:[%s0 + $0x8] sm:$0xf]
  %v239 = vcombine.high %v235, %v235
  %240 = vrot.lane.b32.xlu0 %v235, 111
  %v241 = vpop.permute.xlu0 %240
  %242 = vrot.lane.b32.xlu0 %v239, 111
  %v243 = vpop.permute.xlu0 %242
  %244 = vrot.lane.b32.xlu0 %v236, 111
  %v245 = vpop.permute.xlu0 %244
  %vm246 = vcmask 908288
  %v247 = vsel %vm246, %v241, %v243
  %v248 = vsel %vm246, %v243, %v245
  %v251 = vsel %vm66, %v247, 0.0
  %v252 = vsel %vm67, %v248, 0.0
  %v253 = vpack.c.bf16 %v251, %v251
  %v254 = vpack.c.bf16 %v252, %v252
  %v257 = vunpack.c.l.b16 %v253
  %v258 = vunpack.c.l.b16 %v254
  %v259 = vpack.c.b16 %v258, %v257
  %261 = vst [vmem:[#allocation2 + $0x30] sm:$0x33] %v259
  %v262 = vld [vmem:[%s0] sm:$0xff]
  %v263 = vld [vmem:[%s0 + $0x8] sm:$0xf]
  %v265 = vcombine.high %v262, %v262
  %v267 = vpack.c.bf16 %v262, %v262
  %v268 = vpack.c.bf16 %v265, %v265
  %v269 = vpack.c.bf16 %v263, %v263
  %v273 = vunpack.c.l.b16 %v267
  %v274 = vunpack.c.l.b16 %v268
  %v275 = vunpack.c.l.b16 %v269
  %v276 = vpack.c.b16 %v274, %v273
  %v277 = vpack.c.b16 %v275, %v275
  %v278 = vrot.slane %v276, 6
  %v279 = vrot.slane %v277, 6
  %280 = vrot.lane.b32.xlu0 %v278, 110
  %v281 = vpop.permute.xlu0 %280
  %282 = vrot.lane.b32.xlu0 %v279, 110
  %v283 = vpop.permute.xlu0 %282
  %v284 = vrot.slane %v281, 4
  %v285 = vrot.slane %v283, 4
  %v286 = vsel %vm116, %v284, %v285
  %vm287 = vcmask 900096
  %v288 = vsel %vm287, %v281, %v286
  %290 = vst [vmem:[#allocation2 + $0x30] sm:$0xcc] %v288
  %v291 = vld [vmem:[%s0] sm:$0xff]
  %v292 = vld [vmem:[%s0 + $0x8] sm:$0xf]
  %v295 = vcombine.high %v291, %v291
  %296 = vrot.lane.b32.xlu0 %v291, 109
  %v297 = vpop.permute.xlu0 %296
  %298 = vrot.lane.b32.xlu0 %v295, 109
  %v299 = vpop.permute.xlu0 %298
  %300 = vrot.lane.b32.xlu0 %v292, 109
  %v301 = vpop.permute.xlu0 %300
  %vm302 = vcmask 891904
  %v303 = vsel %vm302, %v297, %v299
  %v304 = vsel %vm302, %v299, %v301
  %v307 = vsel %vm137, %v303, 0.0
  %v308 = vsel %vm138, %v304, 0.0
  %v309 = vpack.c.bf16 %v307, %v307
  %v310 = vpack.c.bf16 %v308, %v308
  %v313 = vunpack.c.l.b16 %v309
  %v314 = vunpack.c.l.b16 %v310
  %v315 = vpack.c.b16 %v314, %v313
  %317 = vst [vmem:[#allocation2 + $0x40] sm:$0x33] %v315
  %v318 = vld [vmem:[%s0] sm:$0xff]
  %v319 = vld [vmem:[%s0 + $0x8] sm:$0xf]
  %v322 = vcombine.high %v318, %v318
  %323 = vrot.lane.b32.xlu0 %v318, 108
  %v324 = vpop.permute.xlu0 %323
  %325 = vrot.lane.b32.xlu0 %v322, 108
  %v326 = vpop.permute.xlu0 %325
  %327 = vrot.lane.b32.xlu0 %v319, 108
  %v328 = vpop.permute.xlu0 %327
  %vm329 = vcmask 883712
  %v330 = vsel %vm329, %v324, %v326
  %v331 = vsel %vm329, %v326, %v328
  %v334 = vsel %vm180, %v330, 0.0
  %v335 = vsel %vm181, %v331, 0.0
  %v336 = vpack.c.bf16 %v334, %v334
  %v337 = vpack.c.bf16 %v335, %v335
  %v340 = vunpack.c.l.b16 %v336
  %v341 = vunpack.c.l.b16 %v337
  %v342 = vpack.c.b16 %v341, %v340
  %v343 = vrot.slane %v342, 6
  %345 = vst [vmem:[#allocation2 + $0x40] sm:$0xcc] %v343
  %v346 = vld [vmem:[%s0] sm:$0xff]
  %v347 = vld [vmem:[%s0 + $0x8] sm:$0xf]
  %v350 = vcombine.high %v346, %v346
  %351 = vrot.lane.b32.xlu0 %v346, 96
  %v352 = vpop.permute.xlu0 %351
  %353 = vrot.lane.b32.xlu0 %v350, 96
  %v354 = vpop.permute.xlu0 %353
  %355 = vrot.lane.b32.xlu0 %v347, 96
  %v356 = vpop.permute.xlu0 %355
  %vm357 = vcmask 785408
  %v358 = vsel %vm357, %v352, %v354
  %v359 = vsel %vm357, %v354, %v356
  %v362 = vsel %vm35, %v358, 0.0
  %v363 = vsel %vm36, %v359, 0.0
  %v364 = vpack.c.bf16 %v362, %v362
  %v365 = vpack.c.bf16 %v363, %v363
  %v368 = vunpack.c.l.b16 %v364
  %v369 = vunpack.c.l.b16 %v365
  %v370 = vpack.c.b16 %v369, %v368
  %372 = vst [vmem:[#allocation2 + $0x50] sm:$0x33] %v370
  %v373 = vld [vmem:[%s0] sm:$0xff]
  %v374 = vld [vmem:[%s0 + $0x8] sm:$0xf]
  %v377 = vcombine.high %v373, %v373
  %378 = vrot.lane.b32.xlu0 %v373, 95
  %v379 = vpop.permute.xlu0 %378
  %380 = vrot.lane.b32.xlu0 %v377, 95
  %v381 = vpop.permute.xlu0 %380
  %382 = vrot.lane.b32.xlu0 %v374, 95
  %v383 = vpop.permute.xlu0 %382
  %vm384 = vcmask 777216
  %v385 = vsel %vm384, %v379, %v381
  %v386 = vsel %vm384, %v381, %v383
  %v389 = vsel %vm66, %v385, 0.0
  %v390 = vsel %vm67, %v386, 0.0
  %v391 = vpack.c.bf16 %v389, %v389
  %v392 = vpack.c.bf16 %v390, %v390
  %v395 = vunpack.c.l.b16 %v391
  %v396 = vunpack.c.l.b16 %v392
  %v397 = vpack.c.b16 %v396, %v395
  %v398 = vrot.slane %v397, 6
  %400 = vst [vmem:[#allocation2 + $0x50] sm:$0xcc] %v398
  %v401 = vld [vmem:[%s0] sm:$0xff]
  %v402 = vld [vmem:[%s0 + $0x8] sm:$0xf]
  %v404 = vcombine.high %v401, %v401
  %v406 = vpack.c.bf16 %v401, %v401
  %v407 = vpack.c.bf16 %v404, %v404
  %v408 = vpack.c.bf16 %v402, %v402
  %v412 = vunpack.c.l.b16 %v406
  %v413 = vunpack.c.l.b16 %v407
  %v414 = vunpack.c.l.b16 %v408
  %v415 = vpack.c.b16 %v413, %v412
  %v416 = vpack.c.b16 %v414, %v414
  %417 = vrot.lane.b32.xlu0 %v415, 94
  %v418 = vpop.permute.xlu0 %417
  %419 = vrot.lane.b32.xlu0 %v416, 94
  %v420 = vpop.permute.xlu0 %419
  %v421 = vrot.slane %v418, 4
  %v422 = vrot.slane %v420, 4
  %v423 = vsel %vm116, %v421, %v422
  %vm424 = vcmask 769024
  %v425 = vsel %vm424, %v418, %v423
  %427 = vst [vmem:[#allocation2 + $0x60] sm:$0x33] %v425
  %v428 = vld [vmem:[%s0] sm:$0xff]
  %v429 = vld [vmem:[%s0 + $0x8] sm:$0xf]
  %v432 = vcombine.high %v428, %v428
  %433 = vrot.lane.b32.xlu0 %v428, 93
  %v434 = vpop.permute.xlu0 %433
  %435 = vrot.lane.b32.xlu0 %v432, 93
  %v436 = vpop.permute.xlu0 %435
  %437 = vrot.lane.b32.xlu0 %v429, 93
  %v438 = vpop.permute.xlu0 %437
  %vm439 = vcmask 760832
  %v440 = vsel %vm439, %v434, %v436
  %v441 = vsel %vm439, %v436, %v438
  %v444 = vsel %vm137, %v440, 0.0
  %v445 = vsel %vm138, %v441, 0.0
  %v446 = vpack.c.bf16 %v444, %v444
  %v447 = vpack.c.bf16 %v445, %v445
  %v450 = vunpack.c.l.b16 %v446
  %v451 = vunpack.c.l.b16 %v447
  %v452 = vpack.c.b16 %v451, %v450
  %v453 = vrot.slane %v452, 6
  %455 = vst [vmem:[#allocation2 + $0x60] sm:$0xcc] %v453
  %v456 = vld [vmem:[%s0] sm:$0xff]
  %v457 = vld [vmem:[%s0 + $0x8] sm:$0xf]
  %v460 = vcombine.high %v456, %v456
  %461 = vrot.lane.b32.xlu0 %v456, 92
  %v462 = vpop.permute.xlu0 %461
  %463 = vrot.lane.b32.xlu0 %v460, 92
  %v464 = vpop.permute.xlu0 %463
  %465 = vrot.lane.b32.xlu0 %v457, 92
  %v466 = vpop.permute.xlu0 %465
  %vm467 = vcmask 752640
  %v468 = vsel %vm467, %v462, %v464
  %v469 = vsel %vm467, %v464, %v466
  %v472 = vsel %vm180, %v468, 0.0
  %v473 = vsel %vm181, %v469, 0.0
  %v474 = vpack.c.bf16 %v472, %v472
  %v475 = vpack.c.bf16 %v473, %v473
  %v478 = vunpack.c.l.b16 %v474
  %v479 = vunpack.c.l.b16 %v475
  %v480 = vpack.c.b16 %v479, %v478
  %482 = vst [vmem:[#allocation2 + $0x70] sm:$0x33] %v480
  %v483 = vld [vmem:[%s0] sm:$0xff]
  %v484 = vld [vmem:[%s0 + $0x8] sm:$0xf]
  %v487 = vcombine.high %v483, %v483
  %488 = vrot.lane.b32.xlu0 %v483, 80
  %v489 = vpop.permute.xlu0 %488
  %490 = vrot.lane.b32.xlu0 %v487, 80
  %v491 = vpop.permute.xlu0 %490
  %492 = vrot.lane.b32.xlu0 %v484, 80
  %v493 = vpop.permute.xlu0 %492
  %vm494 = vcmask 654336
  %v495 = vsel %vm494, %v489, %v491
  %v496 = vsel %vm494, %v491, %v493
  %v499 = vsel %vm35, %v495, 0.0
  %v500 = vsel %vm36, %v496, 0.0
  %v501 = vpack.c.bf16 %v499, %v499
  %v502 = vpack.c.bf16 %v500, %v500
  %v505 = vunpack.c.l.b16 %v501
  %v506 = vunpack.c.l.b16 %v502
  %v507 = vpack.c.b16 %v506, %v505
  %v508 = vrot.slane %v507, 6
  %510 = vst [vmem:[#allocation2 + $0x70] sm:$0xcc] %v508
  %v511 = vld [vmem:[%s0] sm:$0xff]
  %v512 = vld [vmem:[%s0 + $0x8] sm:$0xf]
  %v515 = vcombine.high %v511, %v511
  %516 = vrot.lane.b32.xlu0 %v511, 79
  %v517 = vpop.permute.xlu0 %516
  %518 = vrot.lane.b32.xlu0 %v515, 79
  %v519 = vpop.permute.xlu0 %518
  %520 = vrot.lane.b32.xlu0 %v512, 79
  %v521 = vpop.permute.xlu0 %520
  %vm522 = vcmask 646144
  %v523 = vsel %vm522, %v517, %v519
  %v524 = vsel %vm522, %v519, %v521
  %v527 = vsel %vm66, %v523, 0.0
  %v528 = vsel %vm67, %v524, 0.0
  %v529 = vpack.c.bf16 %v527, %v527
  %v530 = vpack.c.bf16 %v528, %v528
  %v533 = vunpack.c.l.b16 %v529
  %v534 = vunpack.c.l.b16 %v530
  %v535 = vpack.c.b16 %v534, %v533
  %537 = vst [vmem:[#allocation2 + $0x80] sm:$0x33] %v535
  %v538 = vld [vmem:[%s0] sm:$0xff]
  %v539 = vld [vmem:[%s0 + $0x8] sm:$0xf]
  %v541 = vcombine.high %v538, %v538
  %v543 = vpack.c.bf16 %v538, %v538
  %v544 = vpack.c.bf16 %v541, %v541
  %v545 = vpack.c.bf16 %v539, %v539
  %v549 = vunpack.c.l.b16 %v543
  %v550 = vunpack.c.l.b16 %v544
  %v551 = vunpack.c.l.b16 %v545
  %v552 = vpack.c.b16 %v550, %v549
  %v553 = vpack.c.b16 %v551, %v551
  %v554 = vrot.slane %v552, 6
  %v555 = vrot.slane %v553, 6
  %556 = vrot.lane.b32.xlu0 %v554, 78
  %v557 = vpop.permute.xlu0 %556
  %558 = vrot.lane.b32.xlu0 %v555, 78
  %v559 = vpop.permute.xlu0 %558
  %v560 = vrot.slane %v557, 4
  %v561 = vrot.slane %v559, 4
  %v562 = vsel %vm116, %v560, %v561
  %vm563 = vcmask 637952
  %v564 = vsel %vm563, %v557, %v562
  %566 = vst [vmem:[#allocation2 + $0x80] sm:$0xcc] %v564
  %v567 = vld [vmem:[%s0] sm:$0xff]
  %v568 = vld [vmem:[%s0 + $0x8] sm:$0xf]
  %v571 = vcombine.high %v567, %v567
  %572 = vrot.lane.b32.xlu0 %v567, 77
  %v573 = vpop.permute.xlu0 %572
  %574 = vrot.lane.b32.xlu0 %v571, 77
  %v575 = vpop.permute.xlu0 %574
  %576 = vrot.lane.b32.xlu0 %v568, 77
  %v577 = vpop.permute.xlu0 %576
  %vm578 = vcmask 629760
  %v579 = vsel %vm578, %v573, %v575
  %v580 = vsel %vm578, %v575, %v577
  %v583 = vsel %vm137, %v579, 0.0
  %v584 = vsel %vm138, %v580, 0.0
  %v585 = vpack.c.bf16 %v583, %v583
  %v586 = vpack.c.bf16 %v584, %v584
  %v589 = vunpack.c.l.b16 %v585
  %v590 = vunpack.c.l.b16 %v586
  %v591 = vpack.c.b16 %v590, %v589
  %593 = vst [vmem:[#allocation2 + $0x90] sm:$0x33] %v591
  %v594 = vld [vmem:[%s0] sm:$0xff]
  %v595 = vld [vmem:[%s0 + $0x8] sm:$0xf]
  %v598 = vcombine.high %v594, %v594
  %599 = vrot.lane.b32.xlu0 %v594, 76
  %v600 = vpop.permute.xlu0 %599
  %601 = vrot.lane.b32.xlu0 %v598, 76
  %v602 = vpop.permute.xlu0 %601
  %603 = vrot.lane.b32.xlu0 %v595, 76
  %v604 = vpop.permute.xlu0 %603
  %vm605 = vcmask 621568
  %v606 = vsel %vm605, %v600, %v602
  %v607 = vsel %vm605, %v602, %v604
  %v610 = vsel %vm180, %v606, 0.0
  %v611 = vsel %vm181, %v607, 0.0
  %v612 = vpack.c.bf16 %v610, %v610
  %v613 = vpack.c.bf16 %v611, %v611
  %v616 = vunpack.c.l.b16 %v612
  %v617 = vunpack.c.l.b16 %v613
  %v618 = vpack.c.b16 %v617, %v616
  %v619 = vrot.slane %v618, 6
  %621 = vst [vmem:[#allocation2 + $0x90] sm:$0xcc] %v619
  %v622 = vld [vmem:[%s0] sm:$0xff]
  %v623 = vld [vmem:[%s0 + $0x8] sm:$0xf]
  %v626 = vcombine.high %v622, %v622
  %627 = vrot.lane.b32.xlu0 %v622, 64
  %v628 = vpop.permute.xlu0 %627
  %629 = vrot.lane.b32.xlu0 %v626, 64
  %v630 = vpop.permute.xlu0 %629
  %631 = vrot.lane.b32.xlu0 %v623, 64
  %v632 = vpop.permute.xlu0 %631
  %vm633 = vcmask 523264
  %v634 = vsel %vm633, %v628, %v630
  %v635 = vsel %vm633, %v630, %v632
  %v638 = vsel %vm35, %v634, 0.0
  %v639 = vsel %vm36, %v635, 0.0
  %v640 = vpack.c.bf16 %v638, %v638
  %v641 = vpack.c.bf16 %v639, %v639
  %v644 = vunpack.c.l.b16 %v640
  %v645 = vunpack.c.l.b16 %v641
  %v646 = vpack.c.b16 %v645, %v644
  %648 = vst [vmem:[#allocation2 + $0xa0] sm:$0x33] %v646
  %v649 = vld [vmem:[%s0] sm:$0xff]
  %v650 = vld [vmem:[%s0 + $0x8] sm:$0xf]
  %v653 = vcombine.high %v649, %v649
  %654 = vrot.lane.b32.xlu0 %v649, 63
  %v655 = vpop.permute.xlu0 %654
  %656 = vrot.lane.b32.xlu0 %v653, 63
  %v657 = vpop.permute.xlu0 %656
  %658 = vrot.lane.b32.xlu0 %v650, 63
  %v659 = vpop.permute.xlu0 %658
  %vm660 = vcmask 515072
  %v661 = vsel %vm660, %v655, %v657
  %v662 = vsel %vm660, %v657, %v659
  %v665 = vsel %vm66, %v661, 0.0
  %v666 = vsel %vm67, %v662, 0.0
  %v667 = vpack.c.bf16 %v665, %v665
  %v668 = vpack.c.bf16 %v666, %v666
  %v671 = vunpack.c.l.b16 %v667
  %v672 = vunpack.c.l.b16 %v668
  %v673 = vpack.c.b16 %v672, %v671
  %v674 = vrot.slane %v673, 6
  %676 = vst [vmem:[#allocation2 + $0xa0] sm:$0xcc] %v674
  %v677 = vld [vmem:[%s0] sm:$0xff]
  %v678 = vld [vmem:[%s0 + $0x8] sm:$0xf]
  %v680 = vcombine.high %v677, %v677
  %v682 = vpack.c.bf16 %v677, %v677
  %v683 = vpack.c.bf16 %v680, %v680
  %v684 = vpack.c.bf16 %v678, %v678
  %v688 = vunpack.c.l.b16 %v682
  %v689 = vunpack.c.l.b16 %v683
  %v690 = vunpack.c.l.b16 %v684
  %v691 = vpack.c.b16 %v689, %v688
  %v692 = vpack.c.b16 %v690, %v690
  %693 = vrot.lane.b32.xlu0 %v691, 62
  %v694 = vpop.permute.xlu0 %693
  %695 = vrot.lane.b32.xlu0 %v692, 62
  %v696 = vpop.permute.xlu0 %695
  %v697 = vrot.slane %v694, 4
  %v698 = vrot.slane %v696, 4
  %v699 = vsel %vm116, %v697, %v698
  %vm700 = vcmask 506880
  %v701 = vsel %vm700, %v694, %v699
  %703 = vst [vmem:[#allocation2 + $0xb0] sm:$0x33] %v701
  %v704 = vld [vmem:[%s0] sm:$0xff]
  %v705 = vld [vmem:[%s0 + $0x8] sm:$0xf]
  %v708 = vcombine.high %v704, %v704
  %709 = vrot.lane.b32.xlu0 %v704, 61
  %v710 = vpop.permute.xlu0 %709
  %711 = vrot.lane.b32.xlu0 %v708, 61
  %v712 = vpop.permute.xlu0 %711
  %713 = vrot.lane.b32.xlu0 %v705, 61
  %v714 = vpop.permute.xlu0 %713
  %vm715 = vcmask 498688
  %v716 = vsel %vm715, %v710, %v712
  %v717 = vsel %vm715, %v712, %v714
  %v720 = vsel %vm137, %v716, 0.0
  %v721 = vsel %vm138, %v717, 0.0
  %v722 = vpack.c.bf16 %v720, %v720
  %v723 = vpack.c.bf16 %v721, %v721
  %v726 = vunpack.c.l.b16 %v722
  %v727 = vunpack.c.l.b16 %v723
  %v728 = vpack.c.b16 %v727, %v726
  %v729 = vrot.slane %v728, 6
  %731 = vst [vmem:[#allocation2 + $0xb0] sm:$0xcc] %v729
  %v732 = vld [vmem:[%s0] sm:$0xff]
  %v733 = vld [vmem:[%s0 + $0x8] sm:$0xf]
  %v736 = vcombine.high %v732, %v732
  %737 = vrot.lane.b32.xlu0 %v732, 60
  %v738 = vpop.permute.xlu0 %737
  %739 = vrot.lane.b32.xlu0 %v736, 60
  %v740 = vpop.permute.xlu0 %739
  %741 = vrot.lane.b32.xlu0 %v733, 60
  %v742 = vpop.permute.xlu0 %741
  %vm743 = vcmask 490496
  %v744 = vsel %vm743, %v738, %v740
  %v745 = vsel %vm743, %v740, %v742
  %v748 = vsel %vm180, %v744, 0.0
  %v749 = vsel %vm181, %v745, 0.0
  %v750 = vpack.c.bf16 %v748, %v748
  %v751 = vpack.c.bf16 %v749, %v749
  %v754 = vunpack.c.l.b16 %v750
  %v755 = vunpack.c.l.b16 %v751
  %v756 = vpack.c.b16 %v755, %v754
  %758 = vst [vmem:[#allocation2 + $0xc0] sm:$0x33] %v756
  %s759 = scalar_lea.vmem %s0, 12
  %v760 = vld [vmem:[%s759] sm:$0xff]
  %v762 = vcombine.high %v760, %v760
  %v764 = vsel %vm35, %v760, 0.0
  %v765 = vsel %vm36, %v762, 0.0
  %v766 = vpack.c.bf16 %v764, %v764
  %v767 = vpack.c.bf16 %v765, %v765
  %v770 = vunpack.c.l.b16 %v766
  %v771 = vunpack.c.l.b16 %v767
  %v772 = vpack.c.b16 %v771, %v770
  %774 = vst [vmem:[#allocation2 + $0x8] sm:$0x33] %v772
  %v775 = vld [vmem:[%s759] sm:$0xff]
  %v776 = vld [vmem:[%s759 + $0x8] sm:$0xf]
  %v779 = vcombine.high %v775, %v775
  %780 = vrot.lane.b32.xlu0 %v775, 127
  %v781 = vpop.permute.xlu0 %780
  %782 = vrot.lane.b32.xlu0 %v779, 127
  %v783 = vpop.permute.xlu0 %782
  %784 = vrot.lane.b32.xlu0 %v776, 127
  %v785 = vpop.permute.xlu0 %784
  %v786 = vsel %vm77, %v781, %v783
  %v787 = vsel %vm77, %v783, %v785
  %v790 = vsel %vm66, %v786, 0.0
  %v791 = vsel %vm67, %v787, 0.0
  %v792 = vpack.c.bf16 %v790, %v790
  %v793 = vpack.c.bf16 %v791, %v791
  %v796 = vunpack.c.l.b16 %v792
  %v797 = vunpack.c.l.b16 %v793
  %v798 = vpack.c.b16 %v797, %v796
  %v799 = vrot.slane %v798, 6
  %801 = vst [vmem:[#allocation2 + $0x8] sm:$0xcc] %v799
  %v802 = vld [vmem:[%s759] sm:$0xff]
  %v803 = vld [vmem:[%s759 + $0x8] sm:$0xf]
  %v805 = vcombine.high %v802, %v802
  %v807 = vpack.c.bf16 %v802, %v802
  %v808 = vpack.c.bf16 %v805, %v805
  %v809 = vpack.c.bf16 %v803, %v803
  %v813 = vunpack.c.l.b16 %v807
  %v814 = vunpack.c.l.b16 %v808
  %v815 = vunpack.c.l.b16 %v809
  %v816 = vpack.c.b16 %v814, %v813
  %v817 = vpack.c.b16 %v815, %v815
  %818 = vrot.lane.b32.xlu0 %v816, 126
  %v819 = vpop.permute.xlu0 %818
  %820 = vrot.lane.b32.xlu0 %v817, 126
  %v821 = vpop.permute.xlu0 %820
  %v822 = vrot.slane %v819, 4
  %v823 = vrot.slane %v821, 4
  %v824 = vsel %vm116, %v822, %v823
  %v825 = vsel %vm118, %v819, %v824
  %827 = vst [vmem:[#allocation2 + $0x18] sm:$0x33] %v825
  %v828 = vld [vmem:[%s759] sm:$0xff]
  %v829 = vld [vmem:[%s759 + $0x8] sm:$0xf]
  %v832 = vcombine.high %v828, %v828
  %833 = vrot.lane.b32.xlu0 %v828, 125
  %v834 = vpop.permute.xlu0 %833
  %835 = vrot.lane.b32.xlu0 %v832, 125
  %v836 = vpop.permute.xlu0 %835
  %837 = vrot.lane.b32.xlu0 %v829, 125
  %v838 = vpop.permute.xlu0 %837
  %v839 = vsel %vm148, %v834, %v836
  %v840 = vsel %vm148, %v836, %v838
  %v843 = vsel %vm137, %v839, 0.0
  %v844 = vsel %vm138, %v840, 0.0
  %v845 = vpack.c.bf16 %v843, %v843
  %v846 = vpack.c.bf16 %v844, %v844
  %v849 = vunpack.c.l.b16 %v845
  %v850 = vunpack.c.l.b16 %v846
  %v851 = vpack.c.b16 %v850, %v849
  %v852 = vrot.slane %v851, 6
  %854 = vst [vmem:[#allocation2 + $0x18] sm:$0xcc] %v852
  %v855 = vld [vmem:[%s759] sm:$0xff]
  %v856 = vld [vmem:[%s759 + $0x8] sm:$0xf]
  %v859 = vcombine.high %v855, %v855
  %860 = vrot.lane.b32.xlu0 %v855, 124
  %v861 = vpop.permute.xlu0 %860
  %862 = vrot.lane.b32.xlu0 %v859, 124
  %v863 = vpop.permute.xlu0 %862
  %864 = vrot.lane.b32.xlu0 %v856, 124
  %v865 = vpop.permute.xlu0 %864
  %v866 = vsel %vm191, %v861, %v863
  %v867 = vsel %vm191, %v863, %v865
  %v870 = vsel %vm180, %v866, 0.0
  %v871 = vsel %vm181, %v867, 0.0
  %v872 = vpack.c.bf16 %v870, %v870
  %v873 = vpack.c.bf16 %v871, %v871
  %v876 = vunpack.c.l.b16 %v872
  %v877 = vunpack.c.l.b16 %v873
  %v878 = vpack.c.b16 %v877, %v876
  %880 = vst [vmem:[#allocation2 + $0x28] sm:$0x33] %v878
  %v881 = vld [vmem:[%s759] sm:$0xff]
  %v882 = vld [vmem:[%s759 + $0x8] sm:$0xf]
  %v885 = vcombine.high %v881, %v881
  %886 = vrot.lane.b32.xlu0 %v881, 112
  %v887 = vpop.permute.xlu0 %886
  %888 = vrot.lane.b32.xlu0 %v885, 112
  %v889 = vpop.permute.xlu0 %888
  %890 = vrot.lane.b32.xlu0 %v882, 112
  %v891 = vpop.permute.xlu0 %890
  %v892 = vsel %vm218, %v887, %v889
  %v893 = vsel %vm218, %v889, %v891
  %v896 = vsel %vm35, %v892, 0.0
  %v897 = vsel %vm36, %v893, 0.0
  %v898 = vpack.c.bf16 %v896, %v896
  %v899 = vpack.c.bf16 %v897, %v897
  %v902 = vunpack.c.l.b16 %v898
  %v903 = vunpack.c.l.b16 %v899
  %v904 = vpack.c.b16 %v903, %v902
  %v905 = vrot.slane %v904, 6
  %907 = vst [vmem:[#allocation2 + $0x28] sm:$0xcc] %v905
  %v908 = vld [vmem:[%s759] sm:$0xff]
  %v909 = vld [vmem:[%s759 + $0x8] sm:$0xf]
  %v912 = vcombine.high %v908, %v908
  %913 = vrot.lane.b32.xlu0 %v908, 111
  %v914 = vpop.permute.xlu0 %913
  %915 = vrot.lane.b32.xlu0 %v912, 111
  %v916 = vpop.permute.xlu0 %915
  %917 = vrot.lane.b32.xlu0 %v909, 111
  %v918 = vpop.permute.xlu0 %917
  %v919 = vsel %vm246, %v914, %v916
  %v920 = vsel %vm246, %v916, %v918
  %v923 = vsel %vm66, %v919, 0.0
  %v924 = vsel %vm67, %v920, 0.0
  %v925 = vpack.c.bf16 %v923, %v923
  %v926 = vpack.c.bf16 %v924, %v924
  %v929 = vunpack.c.l.b16 %v925
  %v930 = vunpack.c.l.b16 %v926
  %v931 = vpack.c.b16 %v930, %v929
  %933 = vst [vmem:[#allocation2 + $0x38] sm:$0x33] %v931
  %v934 = vld [vmem:[%s759] sm:$0xff]
  %v935 = vld [vmem:[%s759 + $0x8] sm:$0xf]
  %v937 = vcombine.high %v934, %v934
  %v939 = vpack.c.bf16 %v934, %v934
  %v940 = vpack.c.bf16 %v937, %v937
  %v941 = vpack.c.bf16 %v935, %v935
  %v945 = vunpack.c.l.b16 %v939
  %v946 = vunpack.c.l.b16 %v940
  %v947 = vunpack.c.l.b16 %v941
  %v948 = vpack.c.b16 %v946, %v945
  %v949 = vpack.c.b16 %v947, %v947
  %v950 = vrot.slane %v948, 6
  %v951 = vrot.slane %v949, 6
  %952 = vrot.lane.b32.xlu0 %v950, 110
  %v953 = vpop.permute.xlu0 %952
  %954 = vrot.lane.b32.xlu0 %v951, 110
  %v955 = vpop.permute.xlu0 %954
  %v956 = vrot.slane %v953, 4
  %v957 = vrot.slane %v955, 4
  %v958 = vsel %vm116, %v956, %v957
  %v959 = vsel %vm287, %v953, %v958
  %961 = vst [vmem:[#allocation2 + $0x38] sm:$0xcc] %v959
  %v962 = vld [vmem:[%s759] sm:$0xff]
  %v963 = vld [vmem:[%s759 + $0x8] sm:$0xf]
  %v966 = vcombine.high %v962, %v962
  %967 = vrot.lane.b32.xlu0 %v962, 109
  %v968 = vpop.permute.xlu0 %967
  %969 = vrot.lane.b32.xlu0 %v966, 109
  %v970 = vpop.permute.xlu0 %969
  %971 = vrot.lane.b32.xlu0 %v963, 109
  %v972 = vpop.permute.xlu0 %971
  %v973 = vsel %vm302, %v968, %v970
  %v974 = vsel %vm302, %v970, %v972
  %v977 = vsel %vm137, %v973, 0.0
  %v978 = vsel %vm138, %v974, 0.0
  %v979 = vpack.c.bf16 %v977, %v977
  %v980 = vpack.c.bf16 %v978, %v978
  %v983 = vunpack.c.l.b16 %v979
  %v984 = vunpack.c.l.b16 %v980
  %v985 = vpack.c.b16 %v984, %v983
  %987 = vst [vmem:[#allocation2 + $0x48] sm:$0x33] %v985
  %v988 = vld [vmem:[%s759] sm:$0xff]
  %v989 = vld [vmem:[%s759 + $0x8] sm:$0xf]
  %v992 = vcombine.high %v988, %v988
  %993 = vrot.lane.b32.xlu0 %v988, 108
  %v994 = vpop.permute.xlu0 %993
  %995 = vrot.lane.b32.xlu0 %v992, 108
  %v996 = vpop.permute.xlu0 %995
  %997 = vrot.lane.b32.xlu0 %v989, 108
  %v998 = vpop.permute.xlu0 %997
  %v999 = vsel %vm329, %v994, %v996
  %v1000 = vsel %vm329, %v996, %v998
  %v1003 = vsel %vm180, %v999, 0.0
  %v1004 = vsel %vm181, %v1000, 0.0
  %v1005 = vpack.c.bf16 %v1003, %v1003
  %v1006 = vpack.c.bf16 %v1004, %v1004
  %v1009 = vunpack.c.l.b16 %v1005
  %v1010 = vunpack.c.l.b16 %v1006
  %v1011 = vpack.c.b16 %v1010, %v1009
  %v1012 = vrot.slane %v1011, 6
  %1014 = vst [vmem:[#allocation2 + $0x48] sm:$0xcc] %v1012
  %v1015 = vld [vmem:[%s759] sm:$0xff]
  %v1016 = vld [vmem:[%s759 + $0x8] sm:$0xf]
  %v1019 = vcombine.high %v1015, %v1015
  %1020 = vrot.lane.b32.xlu0 %v1015, 96
  %v1021 = vpop.permute.xlu0 %1020
  %1022 = vrot.lane.b32.xlu0 %v1019, 96
  %v1023 = vpop.permute.xlu0 %1022
  %1024 = vrot.lane.b32.xlu0 %v1016, 96
  %v1025 = vpop.permute.xlu0 %1024
  %v1026 = vsel %vm357, %v1021, %v1023
  %v1027 = vsel %vm357, %v1023, %v1025
  %v1030 = vsel %vm35, %v1026, 0.0
  %v1031 = vsel %vm36, %v1027, 0.0
  %v1032 = vpack.c.bf16 %v1030, %v1030
  %v1033 = vpack.c.bf16 %v1031, %v1031
  %v1036 = vunpack.c.l.b16 %v1032
  %v1037 = vunpack.c.l.b16 %v1033
  %v1038 = vpack.c.b16 %v1037, %v1036
  %1040 = vst [vmem:[#allocation2 + $0x58] sm:$0x33] %v1038
  %v1041 = vld [vmem:[%s759] sm:$0xff]
  %v1042 = vld [vmem:[%s759 + $0x8] sm:$0xf]
  %v1045 = vcombine.high %v1041, %v1041
  %1046 = vrot.lane.b32.xlu0 %v1041, 95
  %v1047 = vpop.permute.xlu0 %1046
  %1048 = vrot.lane.b32.xlu0 %v1045, 95
  %v1049 = vpop.permute.xlu0 %1048
  %1050 = vrot.lane.b32.xlu0 %v1042, 95
  %v1051 = vpop.permute.xlu0 %1050
  %v1052 = vsel %vm384, %v1047, %v1049
  %v1053 = vsel %vm384, %v1049, %v1051
  %v1056 = vsel %vm66, %v1052, 0.0
  %v1057 = vsel %vm67, %v1053, 0.0
  %v1058 = vpack.c.bf16 %v1056, %v1056
  %v1059 = vpack.c.bf16 %v1057, %v1057
  %v1062 = vunpack.c.l.b16 %v1058
  %v1063 = vunpack.c.l.b16 %v1059
  %v1064 = vpack.c.b16 %v1063, %v1062
  %v1065 = vrot.slane %v1064, 6
  %1067 = vst [vmem:[#allocation2 + $0x58] sm:$0xcc] %v1065
  %v1068 = vld [vmem:[%s759] sm:$0xff]
  %v1069 = vld [vmem:[%s759 + $0x8] sm:$0xf]
  %v1071 = vcombine.high %v1068, %v1068
  %v1073 = vpack.c.bf16 %v1068, %v1068
  %v1074 = vpack.c.bf16 %v1071, %v1071
  %v1075 = vpack.c.bf16 %v1069, %v1069
  %v1079 = vunpack.c.l.b16 %v1073
  %v1080 = vunpack.c.l.b16 %v1074
  %v1081 = vunpack.c.l.b16 %v1075
  %v1082 = vpack.c.b16 %v1080, %v1079
  %v1083 = vpack.c.b16 %v1081, %v1081
  %1084 = vrot.lane.b32.xlu0 %v1082, 94
  %v1085 = vpop.permute.xlu0 %1084
  %1086 = vrot.lane.b32.xlu0 %v1083, 94
  %v1087 = vpop.permute.xlu0 %1086
  %v1088 = vrot.slane %v1085, 4
  %v1089 = vrot.slane %v1087, 4
  %v1090 = vsel %vm116, %v1088, %v1089
  %v1091 = vsel %vm424, %v1085, %v1090
  %1093 = vst [vmem:[#allocation2 + $0x68] sm:$0x33] %v1091
  %v1094 = vld [vmem:[%s759] sm:$0xff]
  %v1095 = vld [vmem:[%s759 + $0x8] sm:$0xf]
  %v1098 = vcombine.high %v1094, %v1094
  %1099 = vrot.lane.b32.xlu0 %v1094, 93
  %v1100 = vpop.permute.xlu0 %1099
  %1101 = vrot.lane.b32.xlu0 %v1098, 93
  %v1102 = vpop.permute.xlu0 %1101
  %1103 = vrot.lane.b32.xlu0 %v1095, 93
  %v1104 = vpop.permute.xlu0 %1103
  %v1105 = vsel %vm439, %v1100, %v1102
  %v1106 = vsel %vm439, %v1102, %v1104
  %v1109 = vsel %vm137, %v1105, 0.0
  %v1110 = vsel %vm138, %v1106, 0.0
  %v1111 = vpack.c.bf16 %v1109, %v1109
  %v1112 = vpack.c.bf16 %v1110, %v1110
  %v1115 = vunpack.c.l.b16 %v1111
  %v1116 = vunpack.c.l.b16 %v1112
  %v1117 = vpack.c.b16 %v1116, %v1115
  %v1118 = vrot.slane %v1117, 6
  %1120 = vst [vmem:[#allocation2 + $0x68] sm:$0xcc] %v1118
  %v1121 = vld [vmem:[%s759] sm:$0xff]
  %v1122 = vld [vmem:[%s759 + $0x8] sm:$0xf]
  %v1125 = vcombine.high %v1121, %v1121
  %1126 = vrot.lane.b32.xlu0 %v1121, 92
  %v1127 = vpop.permute.xlu0 %1126
  %1128 = vrot.lane.b32.xlu0 %v1125, 92
  %v1129 = vpop.permute.xlu0 %1128
  %1130 = vrot.lane.b32.xlu0 %v1122, 92
  %v1131 = vpop.permute.xlu0 %1130
  %v1132 = vsel %vm467, %v1127, %v1129
  %v1133 = vsel %vm467, %v1129, %v1131
  %v1136 = vsel %vm180, %v1132, 0.0
  %v1137 = vsel %vm181, %v1133, 0.0
  %v1138 = vpack.c.bf16 %v1136, %v1136
  %v1139 = vpack.c.bf16 %v1137, %v1137
  %v1142 = vunpack.c.l.b16 %v1138
  %v1143 = vunpack.c.l.b16 %v1139
  %v1144 = vpack.c.b16 %v1143, %v1142
  %1146 = vst [vmem:[#allocation2 + $0x78] sm:$0x33] %v1144
  %v1147 = vld [vmem:[%s759] sm:$0xff]
  %v1148 = vld [vmem:[%s759 + $0x8] sm:$0xf]
  %v1151 = vcombine.high %v1147, %v1147
  %1152 = vrot.lane.b32.xlu0 %v1147, 80
  %v1153 = vpop.permute.xlu0 %1152
  %1154 = vrot.lane.b32.xlu0 %v1151, 80
  %v1155 = vpop.permute.xlu0 %1154
  %1156 = vrot.lane.b32.xlu0 %v1148, 80
  %v1157 = vpop.permute.xlu0 %1156
  %v1158 = vsel %vm494, %v1153, %v1155
  %v1159 = vsel %vm494, %v1155, %v1157
  %v1162 = vsel %vm35, %v1158, 0.0
  %v1163 = vsel %vm36, %v1159, 0.0
  %v1164 = vpack.c.bf16 %v1162, %v1162
  %v1165 = vpack.c.bf16 %v1163, %v1163
  %v1168 = vunpack.c.l.b16 %v1164
  %v1169 = vunpack.c.l.b16 %v1165
  %v1170 = vpack.c.b16 %v1169, %v1168
  %v1171 = vrot.slane %v1170, 6
  %1173 = vst [vmem:[#allocation2 + $0x78] sm:$0xcc] %v1171
  %v1174 = vld [vmem:[%s759] sm:$0xff]
  %v1175 = vld [vmem:[%s759 + $0x8] sm:$0xf]
  %v1178 = vcombine.high %v1174, %v1174
  %1179 = vrot.lane.b32.xlu0 %v1174, 79
  %v1180 = vpop.permute.xlu0 %1179
  %1181 = vrot.lane.b32.xlu0 %v1178, 79
  %v1182 = vpop.permute.xlu0 %1181
  %1183 = vrot.lane.b32.xlu0 %v1175, 79
  %v1184 = vpop.permute.xlu0 %1183
  %v1185 = vsel %vm522, %v1180, %v1182
  %v1186 = vsel %vm522, %v1182, %v1184
  %v1189 = vsel %vm66, %v1185, 0.0
  %v1190 = vsel %vm67, %v1186, 0.0
  %v1191 = vpack.c.bf16 %v1189, %v1189
  %v1192 = vpack.c.bf16 %v1190, %v1190
  %v1195 = vunpack.c.l.b16 %v1191
  %v1196 = vunpack.c.l.b16 %v1192
  %v1197 = vpack.c.b16 %v1196, %v1195
  %1199 = vst [vmem:[#allocation2 + $0x88] sm:$0x33] %v1197
  %v1200 = vld [vmem:[%s759] sm:$0xff]
  %v1201 = vld [vmem:[%s759 + $0x8] sm:$0xf]
  %v1203 = vcombine.high %v1200, %v1200
  %v1205 = vpack.c.bf16 %v1200, %v1200
  %v1206 = vpack.c.bf16 %v1203, %v1203
  %v1207 = vpack.c.bf16 %v1201, %v1201
  %v1211 = vunpack.c.l.b16 %v1205
  %v1212 = vunpack.c.l.b16 %v1206
  %v1213 = vunpack.c.l.b16 %v1207
  %v1214 = vpack.c.b16 %v1212, %v1211
  %v1215 = vpack.c.b16 %v1213, %v1213
  %v1216 = vrot.slane %v1214, 6
  %v1217 = vrot.slane %v1215, 6
  %1218 = vrot.lane.b32.xlu0 %v1216, 78
  %v1219 = vpop.permute.xlu0 %1218
  %1220 = vrot.lane.b32.xlu0 %v1217, 78
  %v1221 = vpop.permute.xlu0 %1220
  %v1222 = vrot.slane %v1219, 4
  %v1223 = vrot.slane %v1221, 4
  %v1224 = vsel %vm116, %v1222, %v1223
  %v1225 = vsel %vm563, %v1219, %v1224
  %1227 = vst [vmem:[#allocation2 + $0x88] sm:$0xcc] %v1225
  %v1228 = vld [vmem:[%s759] sm:$0xff]
  %v1229 = vld [vmem:[%s759 + $0x8] sm:$0xf]
  %v1232 = vcombine.high %v1228, %v1228
  %1233 = vrot.lane.b32.xlu0 %v1228, 77
  %v1234 = vpop.permute.xlu0 %1233
  %1235 = vrot.lane.b32.xlu0 %v1232, 77
  %v1236 = vpop.permute.xlu0 %1235
  %1237 = vrot.lane.b32.xlu0 %v1229, 77
  %v1238 = vpop.permute.xlu0 %1237
  %v1239 = vsel %vm578, %v1234, %v1236
  %v1240 = vsel %vm578, %v1236, %v1238
  %v1243 = vsel %vm137, %v1239, 0.0
  %v1244 = vsel %vm138, %v1240, 0.0
  %v1245 = vpack.c.bf16 %v1243, %v1243
  %v1246 = vpack.c.bf16 %v1244, %v1244
  %v1249 = vunpack.c.l.b16 %v1245
  %v1250 = vunpack.c.l.b16 %v1246
  %v1251 = vpack.c.b16 %v1250, %v1249
  %1253 = vst [vmem:[#allocation2 + $0x98] sm:$0x33] %v1251
  %v1254 = vld [vmem:[%s759] sm:$0xff]
  %v1255 = vld [vmem:[%s759 + $0x8] sm:$0xf]
  %v1258 = vcombine.high %v1254, %v1254
  %1259 = vrot.lane.b32.xlu0 %v1254, 76
  %v1260 = vpop.permute.xlu0 %1259
  %1261 = vrot.lane.b32.xlu0 %v1258, 76
  %v1262 = vpop.permute.xlu0 %1261
  %1263 = vrot.lane.b32.xlu0 %v1255, 76
  %v1264 = vpop.permute.xlu0 %1263
  %v1265 = vsel %vm605, %v1260, %v1262
  %v1266 = vsel %vm605, %v1262, %v1264
  %v1269 = vsel %vm180, %v1265, 0.0
  %v1270 = vsel %vm181, %v1266, 0.0
  %v1271 = vpack.c.bf16 %v1269, %v1269
  %v1272 = vpack.c.bf16 %v1270, %v1270
  %v1275 = vunpack.c.l.b16 %v1271
  %v1276 = vunpack.c.l.b16 %v1272
  %v1277 = vpack.c.b16 %v1276, %v1275
  %v1278 = vrot.slane %v1277, 6
  %1280 = vst [vmem:[#allocation2 + $0x98] sm:$0xcc] %v1278
  %v1281 = vld [vmem:[%s759] sm:$0xff]
  %v1282 = vld [vmem:[%s759 + $0x8] sm:$0xf]
  %v1285 = vcombine.high %v1281, %v1281
  %1286 = vrot.lane.b32.xlu0 %v1281, 64
  %v1287 = vpop.permute.xlu0 %1286
  %1288 = vrot.lane.b32.xlu0 %v1285, 64
  %v1289 = vpop.permute.xlu0 %1288
  %1290 = vrot.lane.b32.xlu0 %v1282, 64
  %v1291 = vpop.permute.xlu0 %1290
  %v1292 = vsel %vm633, %v1287, %v1289
  %v1293 = vsel %vm633, %v1289, %v1291
  %v1296 = vsel %vm35, %v1292, 0.0
  %v1297 = vsel %vm36, %v1293, 0.0
  %v1298 = vpack.c.bf16 %v1296, %v1296
  %v1299 = vpack.c.bf16 %v1297, %v1297
  %v1302 = vunpack.c.l.b16 %v1298
  %v1303 = vunpack.c.l.b16 %v1299
  %v1304 = vpack.c.b16 %v1303, %v1302
  %1306 = vst [vmem:[#allocation2 + $0xa8] sm:$0x33] %v1304
  %v1307 = vld [vmem:[%s759] sm:$0xff]
  %v1308 = vld [vmem:[%s759 + $0x8] sm:$0xf]
  %v1311 = vcombine.high %v1307, %v1307
  %1312 = vrot.lane.b32.xlu0 %v1307, 63
  %v1313 = vpop.permute.xlu0 %1312
  %1314 = vrot.lane.b32.xlu0 %v1311, 63
  %v1315 = vpop.permute.xlu0 %1314
  %1316 = vrot.lane.b32.xlu0 %v1308, 63
  %v1317 = vpop.permute.xlu0 %1316
  %v1318 = vsel %vm660, %v1313, %v1315
  %v1319 = vsel %vm660, %v1315, %v1317
  %v1322 = vsel %vm66, %v1318, 0.0
  %v1323 = vsel %vm67, %v1319, 0.0
  %v1324 = vpack.c.bf16 %v1322, %v1322
  %v1325 = vpack.c.bf16 %v1323, %v1323
  %v1328 = vunpack.c.l.b16 %v1324
  %v1329 = vunpack.c.l.b16 %v1325
  %v1330 = vpack.c.b16 %v1329, %v1328
  %v1331 = vrot.slane %v1330, 6
  %1333 = vst [vmem:[#allocation2 + $0xa8] sm:$0xcc] %v1331
  %v1334 = vld [vmem:[%s759] sm:$0xff]
  %v1335 = vld [vmem:[%s759 + $0x8] sm:$0xf]
  %v1337 = vcombine.high %v1334, %v1334
  %v1339 = vpack.c.bf16 %v1334, %v1334
  %v1340 = vpack.c.bf16 %v1337, %v1337
  %v1341 = vpack.c.bf16 %v1335, %v1335
  %v1345 = vunpack.c.l.b16 %v1339
  %v1346 = vunpack.c.l.b16 %v1340
  %v1347 = vunpack.c.l.b16 %v1341
  %v1348 = vpack.c.b16 %v1346, %v1345
  %v1349 = vpack.c.b16 %v1347, %v1347
  %1350 = vrot.lane.b32.xlu0 %v1348, 62
  %v1351 = vpop.permute.xlu0 %1350
  %1352 = vrot.lane.b32.xlu0 %v1349, 62
  %v1353 = vpop.permute.xlu0 %1352
  %v1354 = vrot.slane %v1351, 4
  %v1355 = vrot.slane %v1353, 4
  %v1356 = vsel %vm116, %v1354, %v1355
  %v1357 = vsel %vm700, %v1351, %v1356
  %1359 = vst [vmem:[#allocation2 + $0xb8] sm:$0x33] %v1357
  %v1360 = vld [vmem:[%s759] sm:$0xff]
  %v1361 = vld [vmem:[%s759 + $0x8] sm:$0xf]
  %v1364 = vcombine.high %v1360, %v1360
  %1365 = vrot.lane.b32.xlu0 %v1360, 61
  %v1366 = vpop.permute.xlu0 %1365
  %1367 = vrot.lane.b32.xlu0 %v1364, 61
  %v1368 = vpop.permute.xlu0 %1367
  %1369 = vrot.lane.b32.xlu0 %v1361, 61
  %v1370 = vpop.permute.xlu0 %1369
  %v1371 = vsel %vm715, %v1366, %v1368
  %v1372 = vsel %vm715, %v1368, %v1370
  %v1375 = vsel %vm137, %v1371, 0.0
  %v1376 = vsel %vm138, %v1372, 0.0
  %v1377 = vpack.c.bf16 %v1375, %v1375
  %v1378 = vpack.c.bf16 %v1376, %v1376
  %v1381 = vunpack.c.l.b16 %v1377
  %v1382 = vunpack.c.l.b16 %v1378
  %v1383 = vpack.c.b16 %v1382, %v1381
  %v1384 = vrot.slane %v1383, 6
  %1386 = vst [vmem:[#allocation2 + $0xb8] sm:$0xcc] %v1384
  %v1387 = vld [vmem:[%s759] sm:$0xff]
  %v1388 = vld [vmem:[%s759 + $0x8] sm:$0xf]
  %v1391 = vcombine.high %v1387, %v1387
  %1392 = vrot.lane.b32.xlu0 %v1387, 60
  %v1393 = vpop.permute.xlu0 %1392
  %1394 = vrot.lane.b32.xlu0 %v1391, 60
  %v1395 = vpop.permute.xlu0 %1394
  %1396 = vrot.lane.b32.xlu0 %v1388, 60
  %v1397 = vpop.permute.xlu0 %1396
  %v1398 = vsel %vm743, %v1393, %v1395
  %v1399 = vsel %vm743, %v1395, %v1397
  %v1402 = vsel %vm180, %v1398, 0.0
  %v1403 = vsel %vm181, %v1399, 0.0
  %v1404 = vpack.c.bf16 %v1402, %v1402
  %v1405 = vpack.c.bf16 %v1403, %v1403
  %v1408 = vunpack.c.l.b16 %v1404
  %v1409 = vunpack.c.l.b16 %v1405
  %v1410 = vpack.c.b16 %v1409, %v1408
  %1412 = vst [vmem:[#allocation2 + $0xc8] sm:$0x33] %v1410
  %v1413 = vld [vmem:[#allocation2] sm:$0xff]
  %v1414 = vld [vmem:[#allocation2 + $0x8] sm:$0xff]
  %v1415 = vld [vmem:[#allocation2 + $0x10] sm:$0xff]
  %v1416 = vld [vmem:[#allocation2 + $0x18] sm:$0xff]
  %v1417 = vld [vmem:[#allocation2 + $0x20] sm:$0xff]
  %v1418 = vld [vmem:[#allocation2 + $0x28] sm:$0xff]
  %v1419 = vld [vmem:[#allocation2 + $0x30] sm:$0xff]
  %v1420 = vld [vmem:[#allocation2 + $0x38] sm:$0xff]
  %v1421 = vld [vmem:[#allocation2 + $0x40] sm:$0xff]
  %v1422 = vld [vmem:[#allocation2 + $0x48] sm:$0xff]
  %v1423 = vld [vmem:[#allocation2 + $0x50] sm:$0xff]
  %v1424 = vld [vmem:[#allocation2 + $0x58] sm:$0xff]
  %v1425 = vld [vmem:[#allocation2 + $0x60] sm:$0xff]
  %v1426 = vld [vmem:[#allocation2 + $0x68] sm:$0xff]
  %v1427 = vld [vmem:[#allocation2 + $0x70] sm:$0xff]
  %v1428 = vld [vmem:[#allocation2 + $0x78] sm:$0xff]
  %v1429 = vld [vmem:[#allocation2 + $0x80] sm:$0xff]
  %v1430 = vld [vmem:[#allocation2 + $0x88] sm:$0xff]
  %v1431 = vld [vmem:[#allocation2 + $0x90] sm:$0xff]
  %v1432 = vld [vmem:[#allocation2 + $0x98] sm:$0xff]
  %v1433 = vld [vmem:[#allocation2 + $0xa0] sm:$0xff]
  %v1434 = vld [vmem:[#allocation2 + $0xa8] sm:$0xff]
  %v1435 = vld [vmem:[#allocation2 + $0xb0] sm:$0xff]
  %v1436 = vld [vmem:[#allocation2 + $0xb8] sm:$0xff]
  %v1437 = vld [vmem:[#allocation2 + $0xc0] sm:$0x33]
  %v1438 = vld [vmem:[#allocation2 + $0xc8] sm:$0x33]
  %1440 = vset.pattern.permute.xlu0 0
  %1441 = vperm.xlu0 %1440, %v20
  %v1442 = vpop.permute.xlu0 %1441
  %v1470 = vunpack.c.l.b16 %v1413
  %v1471 = vunpack.c.h.b16 %v1413
  %v1472 = vunpack.c.l.b16 %v1414
  %v1473 = vunpack.c.h.b16 %v1414
  %v1474 = vunpack.c.l.b16 %v1415
  %v1475 = vunpack.c.h.b16 %v1415
  %v1476 = vunpack.c.l.b16 %v1416
  %v1477 = vunpack.c.h.b16 %v1416
  %v1478 = vunpack.c.l.b16 %v1417
  %v1479 = vunpack.c.h.b16 %v1417
  %v1480 = vunpack.c.l.b16 %v1418
  %v1481 = vunpack.c.h.b16 %v1418
  %v1482 = vunpack.c.l.b16 %v1419
  %v1483 = vunpack.c.h.b16 %v1419
  %v1484 = vunpack.c.l.b16 %v1420
  %v1485 = vunpack.c.h.b16 %v1420
  %v1486 = vunpack.c.l.b16 %v1421
  %v1487 = vunpack.c.h.b16 %v1421
  %v1488 = vunpack.c.l.b16 %v1422
  %v1489 = vunpack.c.h.b16 %v1422
  %v1490 = vunpack.c.l.b16 %v1423
  %v1491 = vunpack.c.h.b16 %v1423
  %v1492 = vunpack.c.l.b16 %v1424
  %v1493 = vunpack.c.h.b16 %v1424
  %v1494 = vunpack.c.l.b16 %v1425
  %v1495 = vunpack.c.h.b16 %v1425
  %v1496 = vunpack.c.l.b16 %v1426
  %v1497 = vunpack.c.h.b16 %v1426
  %v1498 = vunpack.c.l.b16 %v1427
  %v1499 = vunpack.c.h.b16 %v1427
  %v1500 = vunpack.c.l.b16 %v1428
  %v1501 = vunpack.c.h.b16 %v1428
  %v1502 = vunpack.c.l.b16 %v1429
  %v1503 = vunpack.c.h.b16 %v1429
  %v1504 = vunpack.c.l.b16 %v1430
  %v1505 = vunpack.c.h.b16 %v1430
  %v1506 = vunpack.c.l.b16 %v1431
  %v1507 = vunpack.c.h.b16 %v1431
  %v1508 = vunpack.c.l.b16 %v1432
  %v1509 = vunpack.c.h.b16 %v1432
  %v1510 = vunpack.c.l.b16 %v1433
  %v1511 = vunpack.c.h.b16 %v1433
  %v1512 = vunpack.c.l.b16 %v1434
  %v1513 = vunpack.c.h.b16 %v1434
  %v1514 = vunpack.c.l.b16 %v1435
  %v1515 = vunpack.c.h.b16 %v1435
  %v1516 = vunpack.c.l.b16 %v1436
  %v1517 = vunpack.c.h.b16 %v1436
  %v1518 = vunpack.c.l.b16 %v1437
  %v1519 = vunpack.c.h.b16 %v1437
  %v1520 = vunpack.c.l.b16 %v1438
  %v1521 = vunpack.c.h.b16 %v1438
  %v1522 = vpack.c.b16 %v1474, %v1470
  %v1523 = vpack.c.b16 %v1475, %v1471
  %v1524 = vpack.c.b16 %v1476, %v1472
  %v1525 = vpack.c.b16 %v1477, %v1473
  %v1526 = vpack.c.b16 %v1482, %v1478
  %v1527 = vpack.c.b16 %v1483, %v1479
  %v1528 = vpack.c.b16 %v1484, %v1480
  %v1529 = vpack.c.b16 %v1485, %v1481
  %v1530 = vpack.c.b16 %v1490, %v1486
  %v1531 = vpack.c.b16 %v1491, %v1487
  %v1532 = vpack.c.b16 %v1492, %v1488
  %v1533 = vpack.c.b16 %v1493, %v1489
  %v1534 = vpack.c.b16 %v1498, %v1494
  %v1535 = vpack.c.b16 %v1499, %v1495
  %v1536 = vpack.c.b16 %v1500, %v1496
  %v1537 = vpack.c.b16 %v1501, %v1497
  %v1538 = vpack.c.b16 %v1506, %v1502
  %v1539 = vpack.c.b16 %v1507, %v1503
  %v1540 = vpack.c.b16 %v1508, %v1504
  %v1541 = vpack.c.b16 %v1509, %v1505
  %v1542 = vpack.c.b16 %v1514, %v1510
  %v1543 = vpack.c.b16 %v1515, %v1511
  %v1544 = vpack.c.b16 %v1516, %v1512
  %v1545 = vpack.c.b16 %v1517, %v1513
  %v1546 = vpack.c.b16 %v1518, %v1518
  %v1547 = vpack.c.b16 %v1519, %v1519
  %v1548 = vpack.c.b16 %v1520, %v1520
  %v1549 = vpack.c.b16 %v1521, %v1521
  %vm1574 = vcmask 818176
  %v1576 = vsel %vm1574, %v19, 0
  %vm1578 = vcmask 1041408
  %v1580 = vsel %vm1578, %v1546, 0
  %v1583 = vsel %vm1578, %v1547, 0
  %v1586 = vsel %vm1578, %v1548, 0
  %v1589 = vsel %vm1578, %v1549, 0
  %1591 = vmatprep.subr.bf16.mxu0 %v1523
  %1592 = vmatpush1.bf16.msra.mxu0 %v1522
  %1593 = vmatprep.subr.bf16.mxu0 %v1527
  %1594 = vmatpush1.bf16.msra.mxu0 %v1526
  %1595 = vmatprep.subr.bf16.mxu0 %v1531
  %1596 = vmatpush1.bf16.msra.mxu0 %v1530
  %1597 = vmatprep.subr.bf16.mxu0 %v1535
  %1598 = vmatpush1.bf16.msra.mxu0 %v1534
  %1599 = vmatprep.subr.bf16.mxu0 %v1539
  %1600 = vmatpush1.bf16.msra.mxu0 %v1538
  %1601 = vmatprep.subr.bf16.mxu0 %v1543
  %1602 = vmatpush1.bf16.msra.mxu0 %v1542
  %1603 = vmatprep.subr.bf16.mxu0 %v1583
  %1604 = vmatpush1.bf16.msra.mxu0 %v1580
  %1605 = vmatprep.subr.bf16.mxu0 0
  %1606 = vmatpush1.bf16.msra.mxu0 0
  %1607 = vmatprep.subr.bf16.mxu0 0
  %1608 = vmatpush1.bf16.msra.mxu0 0
  %1609 = vmatprep.subr.bf16.mxu0 0
  %1610 = vmatpush1.bf16.msra.mxu0 0
  %1611 = vmatprep.subr.bf16.mxu0 0
  %1612 = vmatpush1.bf16.msra.mxu0 0
  %1613 = vmatprep.subr.bf16.mxu0 0
  %1614 = vmatpush1.bf16.msra.mxu0 0
  %1615 = vmatprep.subr.bf16.mxu0 0
  %1616 = vmatpush1.bf16.msra.mxu0 0
  %1617 = vmatprep.subr.bf16.mxu0 0
  %1618 = vmatpush1.bf16.msra.mxu0 0
  %1619 = vmatprep.subr.bf16.mxu0 0
  %1620 = vmatpush1.bf16.msra.mxu0 0
  %1621 = vmatprep.subr.bf16.mxu0 0
  %1622 = vmatpush1.bf16.msra.mxu0 0
  %1623 = vmatprep.mubr.bf16.mxu0 0
  %1624 = vmatmul.mubr.bf16.gmra.mrb[0].mxu0 %v1576
  %v1625 = vpop.f32.mrb[0].mxu0
  %v1626 = vadd.f32 %v1442, %v1625
  %v1627 = vpop.f32.mrb[0].mxu0
  %v1628 = vadd.f32 %v1442, %v1627
  %v1629 = vpop.f32.mrb[0].mxu0
  %v1630 = vpop.f32.mrb[0].mxu0
  %1631 = vdwg.mxu0
  %1632 = vmatprep.subr.bf16.mxu0 %v1525
  %1633 = vmatpush1.bf16.msra.mxu0 %v1524
  %1634 = vmatprep.subr.bf16.mxu0 %v1529
  %1635 = vmatpush1.bf16.msra.mxu0 %v1528
  %1636 = vmatprep.subr.bf16.mxu0 %v1533
  %1637 = vmatpush1.bf16.msra.mxu0 %v1532
  %1638 = vmatprep.subr.bf16.mxu0 %v1537
  %1639 = vmatpush1.bf16.msra.mxu0 %v1536
  %1640 = vmatprep.subr.bf16.mxu0 %v1541
  %1641 = vmatpush1.bf16.msra.mxu0 %v1540
  %1642 = vmatprep.subr.bf16.mxu0 %v1545
  %1643 = vmatpush1.bf16.msra.mxu0 %v1544
  %1644 = vmatprep.subr.bf16.mxu0 %v1589
  %1645 = vmatpush1.bf16.msra.mxu0 %v1586
  %1646 = vmatprep.subr.bf16.mxu0 0
  %1647 = vmatpush1.bf16.msra.mxu0 0
  %1648 = vmatprep.subr.bf16.mxu0 0
  %1649 = vmatpush1.bf16.msra.mxu0 0
  %1650 = vmatprep.subr.bf16.mxu0 0
  %1651 = vmatpush1.bf16.msra.mxu0 0
  %1652 = vmatprep.subr.bf16.mxu0 0
  %1653 = vmatpush1.bf16.msra.mxu0 0
  %1654 = vmatprep.subr.bf16.mxu0 0
  %1655 = vmatpush1.bf16.msra.mxu0 0
  %1656 = vmatprep.subr.bf16.mxu0 0
  %1657 = vmatpush1.bf16.msra.mxu0 0
  %1658 = vmatprep.subr.bf16.mxu0 0
  %1659 = vmatpush1.bf16.msra.mxu0 0
  %1660 = vmatprep.subr.bf16.mxu0 0
  %1661 = vmatpush1.bf16.msra.mxu0 0
  %1662 = vmatprep.subr.bf16.mxu0 0
  %1663 = vmatpush1.bf16.msra.mxu0 0
  %1664 = vmatprep.mubr.bf16.mxu0 0
  %1665 = vmatmul.mubr.bf16.gmra.mrb[0].mxu0 %v1576
  %v1666 = vpop.f32.mrb[0].mxu0
  %v1667 = vadd.f32 %v1442, %v1666
  %v1668 = vpop.f32.mrb[0].mxu0
  %v1669 = vadd.f32 %v1442, %v1668
  %v1670 = vpop.f32.mrb[0].mxu0
  %v1671 = vpop.f32.mrb[0].mxu0
  %1672 = vdwg.mxu0
  %v1673 = vmax.f32 %v1626, 0.0
  %v1674 = vmax.f32 %v1628, 0.0
  %v1675 = vmax.f32 %v1667, 0.0
  %v1676 = vmax.f32 %v1669, 0.0
  %v1677 = vld [vmem:[%s0] sm:$0xff]
  %v1678 = vld [vmem:[%s0 + $0x8] sm:$0xf]
  %v1681 = vcombine.high %v1677, %v1677
  %1682 = vrot.lane.b32.xlu0 %v1677, 94
  %v1683 = vpop.permute.xlu0 %1682
  %1684 = vrot.lane.b32.xlu0 %v1681, 94
  %v1685 = vpop.permute.xlu0 %1684
  %1686 = vrot.lane.b32.xlu0 %v1678, 94
  %v1687 = vpop.permute.xlu0 %1686
  %vm1688 = vcmask 769024
  %v1689 = vsel %vm1688, %v1683, %v1685
  %v1690 = vsel %vm1688, %v1685, %v1687
  %1693 = vst [vmem:[%s4] sm:$0xf] %v1689
  %1694 = vst [vmem:[%s4 + $0x8] sm:$0xf] %v1690
  %v1697 = vrot.slane %v1673, 4
  %v1698 = vrot.slane %v1674, 4
  %1701 = vst [vmem:[%s4] sm:$0xf0] %v1697
  %1702 = vst [vmem:[%s4 + $0x8] sm:$0xf0] %v1698
  %1703 = vst [vmem:[%s4 + $0x10] sm:$0xf] %v1697
  %1704 = vst [vmem:[%s4 + $0x18] sm:$0xf] %v1698
  %v1705 = vld [vmem:[%s759] sm:$0xff]
  %v1706 = vld [vmem:[%s759 + $0x8] sm:$0xf]
  %v1709 = vcombine.high %v1705, %v1705
  %1710 = vrot.lane.b32.xlu0 %v1705, 94
  %v1711 = vpop.permute.xlu0 %1710
  %1712 = vrot.lane.b32.xlu0 %v1709, 94
  %v1713 = vpop.permute.xlu0 %1712
  %1714 = vrot.lane.b32.xlu0 %v1706, 94
  %v1715 = vpop.permute.xlu0 %1714
  %v1716 = vsel %vm1688, %v1711, %v1713
  %v1717 = vsel %vm1688, %v1713, %v1715
  %s1720 = scalar_lea.vmem %s4, 32
  %1721 = vst [vmem:[%s1720] sm:$0xf] %v1716
  %1722 = vst [vmem:[%s1720 + $0x8] sm:$0xf] %v1717
  %v1725 = vrot.slane %v1675, 4
  %v1726 = vrot.slane %v1676, 4
  %1729 = vst [vmem:[%s1720] sm:$0xf0] %v1725
  %1730 = vst [vmem:[%s1720 + $0x8] sm:$0xf0] %v1726
  %1731 = vst [vmem:[%s1720 + $0x10] sm:$0xf] %v1725
  %1732 = vst [vmem:[%s1720 + $0x18] sm:$0xf] %v1726
  // Predicated region
  $region18: #{dense_layer_forward.1} parent=0 // pred_check
    _
  $region19: #{dense_layer_forward.1} parent=0 // pred_check_branch
    %1734 = sbr.rel (0) target = $region21
  $region20: #{dense_layer_forward.1} parent=0 // pred_region
    _
  $region21: #{dense_layer_forward.1} parent=0 // pred_fallthru
    _
  // Predicated region
  $region22: #{dense_layer_forward.1} parent=0 // pred_check
    _
  $region23: #{dense_layer_forward.1} parent=0 // pred_check_branch
    %1736 = sbr.rel (0) target = $region25
  $region24: #{dense_layer_forward.1} parent=0 // pred_region
    _
  $region25: #{dense_layer_forward.1} parent=0 // pred_fallthru
    _

</llo_original>
